<compile_context>
chip_gen: v7x
topology: tpu7x:2x2x1
jax: 0.10.0
libtpu: 0.0.40
codegen_flags: <defaults>
</compile_context>

<pallas_src>
import functools

import jax
import jax.numpy as jnp
from jax import lax
from jax.experimental import pallas as pl
from jax.experimental.pallas import tpu as pltpu


# ----------------------------------------------------------------------------
# Glue: PyTorch-exact nearest interpolation, unfold, fold (plain JAX)
# ----------------------------------------------------------------------------
def interp_nearest(mask, H, W):
    """F.interpolate(mode='nearest') semantics: src = floor(dst * in/out)."""
    _, _, Hm, Wm = mask.shape
    ih = jnp.floor(jnp.arange(H) * (Hm / H)).astype(jnp.int32)
    iw = jnp.floor(jnp.arange(W) * (Wm / W)).astype(jnp.int32)
    return mask[:, :, ih, :][:, :, :, iw]


def unfold_patches(x, ksize):
    """F.unfold(kernel=ksize, stride=1, pad=ksize//2).permute(0,2,1).
    x: (B, C, H, W) -> (B, H*W, C*ksize*ksize), channel-major patch order."""
    B, C, H, W = x.shape
    pad = ksize // 2
    xp = jnp.pad(x, ((0, 0), (0, 0), (pad, pad), (pad, pad)))
    slabs = []
    for kh in range(ksize):
        for kw in range(ksize):
            slabs.append(xp[:, :, kh:kh + H, kw:kw + W])
    p = jnp.stack(slabs, axis=2)                 # (B, C, k*k, H, W)
    p = p.reshape(B, C * ksize * ksize, H * W)   # (B, C*k*k, L)
    return p.transpose(0, 2, 1)                  # (B, L, C*k*k)


def fold_patches(p, H, W, ksize):
    """F.fold(output=(H,W), kernel=ksize, stride=1, pad=ksize//2) on the
    permuted-back patches. p: (B, L, C*k*k) -> (B, C, H, W), overlaps summed."""
    B, L, CK = p.shape
    C = CK // (ksize * ksize)
    pad = ksize // 2
    p = p.transpose(0, 2, 1).reshape(B, C, ksize * ksize, H, W)
    out = jnp.zeros((B, C, H + 2 * pad, W + 2 * pad), p.dtype)
    idx = 0
    for kh in range(ksize):
        for kw in range(ksize):
            out = out.at[:, :, kh:kh + H, kw:kw + W].add(p[:, :, idx])
            idx += 1
    return out[:, :, pad:pad + H, pad:pad + W]


# ----------------------------------------------------------------------------
# Pallas kernel: row-tiled contextual attention over patches
# ----------------------------------------------------------------------------
def _ctx_attn_kernel(fg_ref, bg_ref, bgsq_ref, o_ref, *, lam, L):
    fg = fg_ref[0]            # (TQ, Ppad) bf16  -- row tile of query patches
    bg = bg_ref[0]            # (L,  Ppad) bf16  -- all key/value patches
    bg_sq = bgsq_ref[0]       # (1, L)     f32   -- precomputed row norms of bg

    # sim[q, l] = <fg[q, :], bg[l, :]>; transpose folded into the matmul.
    sim = lax.dot_general(
        fg, bg,
        dimension_numbers=(((1,), (1,)), ((), ())),
        preferred_element_type=jnp.float32)                       # (TQ, L)

    # dists = bg_sq.T + fg_sq - 2*sim.  fg_sq is constant along the
    # softmax / normalization axis, so it cancels out of (dists - mean)/std
    # and out of the softmax -> drop it entirely.
    d = bg_sq - 2.0 * sim                                          # (TQ, L)

    # Mean-centered variance (torch.std default is unbiased, divide by N-1);
    # the centered tensor is reused for the tanh argument below.
    mean = jnp.sum(d, axis=-1, keepdims=True) * (1.0 / L)          # (TQ, 1)
    dc = d - mean                                                  # (TQ, L)
    var = jnp.sum(dc * dc, axis=-1, keepdims=True) * (1.0 / max(L - 1, 1))
    inv_std = pl.reciprocal(jnp.sqrt(var) + 1e-6, approx=True)     # EUP, (TQ,1)

    # logits bounded in [-lam, lam] -> exp is safe without max-subtraction.
    logits = -lam * jnp.tanh(dc * inv_std)
    p = jnp.exp(logits)
    inv_den = pl.reciprocal(jnp.sum(p, axis=-1, keepdims=True), approx=True)
    attn = (p * inv_den).astype(bg.dtype)                          # (TQ, L) bf16

    out = jnp.dot(attn, bg, preferred_element_type=jnp.float32)    # (TQ, Ppad)
    o_ref[0] = out.astype(o_ref.dtype)


def _pick_tq_and_vmem(L, Ppad):
    """Largest row tile whose working set fits a conservative VMEM budget
    (safe on v7x's 64 MiB physical VMEM), plus a matching vmem_limit."""
    budget = 48 * 1024 * 1024
    # Buffers resident per batch (independent of TQ); bg is double-buffered
    # by the pipeline even though it is only re-fetched when b changes.
    resident = 2 * L * Ppad * 2 + 2 * L * 4
    candidates = [t for t in (512, 256, 128, 64, 32, 16, 8) if L % t == 0]
    if not candidates:
        candidates = [L]
    for tq in candidates:
        io = 2 * (tq * Ppad * 2) + 2 * (tq * Ppad * 4)     # fg in + out, 2-buf
        temps = 5 * tq * L * 4                              # sim/d/dc/p + attn
        total = resident + io + temps
        if total <= budget:
            vmem_limit = int(min(max(total + (8 << 20), 32 << 20), budget))
            return tq, vmem_limit
    return candidates[-1], budget


def contextual_attention(fg_patches, bg_patches, lam):
    """fg/bg patches: (B, L, P) f32 -> attention output (B, L, P) f32."""
    B, L, P = fg_patches.shape
    Ppad = ((P + 127) // 128) * 128          # lane-dense last dim
    TQ, vmem_limit = _pick_tq_and_vmem(L, Ppad)
    nq = L // TQ

    # bg row norms in f32 (before the bf16 cast); padded zeros contribute 0.
    bg_sq = jnp.sum(bg_patches * bg_patches, axis=2)[:, None, :]   # (B, 1, L)

    pad = Ppad - P
    fg_b = jnp.pad(fg_patches, ((0, 0), (0, 0), (0, pad))).astype(jnp.bfloat16)
    bg_b = jnp.pad(bg_patches, ((0, 0), (0, 0), (0, pad))).astype(jnp.bfloat16)

    kernel = functools.partial(_ctx_attn_kernel, lam=lam, L=L)
    out = pl.pallas_call(
        kernel,
        out_shape=jax.ShapeDtypeStruct((B, L, Ppad), jnp.float32),
        grid_spec=pltpu.PrefetchScalarGridSpec(
            num_scalar_prefetch=0,
            grid=(B, nq),
            in_specs=[
                pl.BlockSpec((1, TQ, Ppad), lambda b, q: (b, q, 0)),  # fg rows
                pl.BlockSpec((1, L, Ppad), lambda b, q: (b, 0, 0)),   # bg resident
                pl.BlockSpec((1, 1, L), lambda b, q: (b, 0, 0)),      # bg norms
            ],
            out_specs=pl.BlockSpec((1, TQ, Ppad), lambda b, q: (b, q, 0)),
        ),
        compiler_params=pltpu.CompilerParams(
            dimension_semantics=("parallel", "parallel"),
            vmem_limit_bytes=vmem_limit,
        ),
    )(fg_b, bg_b, bg_sq)
    return out[:, :, :P] if pad else out


# ----------------------------------------------------------------------------
# Full forward (matches ContextualBlockTFStyle.forward)
# ----------------------------------------------------------------------------
def contextual_block_tf_style(bg_in, fg_in, mask, *, ksize=3, lam=0.1):
    B, C, H, W = bg_in.shape
    mask = interp_nearest(mask, H, W)                 # (B, 1, H, W)
    mask_r = jnp.broadcast_to(mask, (B, C, H, W))
    bg = bg_in * (1.0 - mask_r)

    # TODO(synk): fuse unfold/fold into the kernel as k^2 spatially-shifted
    # (L, C) matmuls to cut HBM traffic ~k^2x and raise MXU contraction depth.
    bg_patches = unfold_patches(bg, ksize)            # (B, L, C*k*k)
    fg_patches = unfold_patches(fg_in, ksize)         # (B, L, C*k*k)

    out_patches = contextual_attention(
        fg_patches.astype(jnp.float32), bg_patches.astype(jnp.float32), lam)

    out = fold_patches(out_patches, H, W, ksize)      # (B, C, H, W)
    acl = bg + out * mask_r
    return acl


# Pure-JAX f32 reference (original formula, no simplifications) for checking.
def _reference(bg_in, fg_in, mask, *, ksize=3, lam=0.1):
    B, C, H, W = bg_in.shape
    mask = interp_nearest(mask, H, W)
    mask_r = jnp.broadcast_to(mask, (B, C, H, W))
    bg = bg_in * (1.0 - mask_r)
    bgp = unfold_patches(bg, ksize)
    fgp = unfold_patches(fg_in, ksize)
    bg_sq = jnp.sum(bgp ** 2, axis=2, keepdims=True)
    fg_sq = jnp.sum(fgp ** 2, axis=2, keepdims=True)
    sim = jnp.einsum('blp,bmp->blm', fgp, bgp)
    dists = jnp.swapaxes(bg_sq, 1, 2) + fg_sq - 2.0 * sim
    mean = jnp.mean(dists, axis=2, keepdims=True)
    L = dists.shape[2]
    std = jnp.sqrt(jnp.sum((dists - mean) ** 2, axis=2, keepdims=True) / (L - 1)) + 1e-6
    attn = jax.nn.softmax(-lam * jnp.tanh((dists - mean) / std), axis=-1)
    out = jnp.einsum('blm,bmp->blp', attn, bgp)
    out = fold_patches(out, H, W, ksize)
    return bg + out * mask_r


if __name__ == "__main__":
    key = jax.random.PRNGKey(0)
    B, C, H, W = 2, 4, 16, 16
    k1, k2, k3 = jax.random.split(key, 3)
    bg_in = jax.random.normal(k1, (B, C, H, W), dtype=jnp.float32)
    fg_in = jax.random.normal(k2, (B, C, H, W), dtype=jnp.float32)
    mask = (jax.random.uniform(k3, (B, 1, 8, 8)) > 0.5).astype(jnp.float32)

    fwd = jax.jit(functools.partial(contextual_block_tf_style, ksize=3, lam=0.1))
    acl = jax.block_until_ready(fwd(bg_in, fg_in, mask))

    ref = _reference(bg_in, fg_in, mask, ksize=3, lam=0.1)
    assert acl.shape == (B, C, H, W)
    assert jnp.max(jnp.abs(acl - ref)) < 3e-2, "mismatch vs JAX reference"
    print("KERNEL_OK")
</pallas_src>

<mosaic_0001>
module attributes {stable_mosaic.version = 11 : i64} {
  func.func @_ctx_attn_kernel(%arg0: i32, %arg1: i32, %arg2: memref<1x256x128xbf16, #tpu.memory_space<vmem>>, %arg3: memref<1x256x128xbf16, #tpu.memory_space<vmem>>, %arg4: memref<1x1x256xf32, #tpu.memory_space<vmem>>, %arg5: memref<1x256x128xf32, #tpu.memory_space<vmem>>) attributes {dimension_semantics = [#tpu.dimension_semantics<parallel>, #tpu.dimension_semantics<parallel>], iteration_bounds = array<i64: 2, 1>, scalar_prefetch = 0 : i64, scratch_operands = 0 : i64, tpu.core_type = #tpu.core_type<tc>, window_params = [{transform_indices = @transform_0, window_bounds = array<i64: 1, 256, 128>}, {transform_indices = @transform_1, window_bounds = array<i64: 1, 256, 128>}, {transform_indices = @transform_2, window_bounds = array<i64: 1, 1, 256>}, {transform_indices = @transform_3, window_bounds = array<i64: 1, 256, 128>}]} {
    %c0 = arith.constant 0 : index
    %c0_0 = arith.constant 0 : index
    %c0_1 = arith.constant 0 : index
    %0 = vector.load %arg2[%c0, %c0_0, %c0_1] : memref<1x256x128xbf16, #tpu.memory_space<vmem>>, vector<1x256x128xbf16>
    %1 = vector.shape_cast %0 : vector<1x256x128xbf16> to vector<256x128xbf16>
    %c0_2 = arith.constant 0 : index
    %c0_3 = arith.constant 0 : index
    %c0_4 = arith.constant 0 : index
    %2 = vector.load %arg3[%c0_2, %c0_3, %c0_4] : memref<1x256x128xbf16, #tpu.memory_space<vmem>>, vector<1x256x128xbf16>
    %3 = vector.shape_cast %2 : vector<1x256x128xbf16> to vector<256x128xbf16>
    %c0_5 = arith.constant 0 : index
    %c0_6 = arith.constant 0 : index
    %c0_7 = arith.constant 0 : index
    %4 = vector.load %arg4[%c0_5, %c0_6, %c0_7] : memref<1x1x256xf32, #tpu.memory_space<vmem>>, vector<1x1x256xf32>
    %5 = vector.shape_cast %4 : vector<1x1x256xf32> to vector<1x256xf32>
    %cst = arith.constant dense<0.000000e+00> : vector<256x256xf32>
    %6 = tpu.matmul %1, %3, %cst {dimension_numbers = #tpu.dot_dimension_numbers<[1], [1], [0], [0], [0, 0, 1, 0], [], []>} : vector<256x128xbf16>, vector<256x128xbf16>, vector<256x256xf32> -> vector<256x256xf32>
    %cst_8 = arith.constant 2.000000e+00 : f32
    %7 = vector.broadcast %cst_8 : f32 to vector<256x256xf32>
    %8 = arith.mulf %7, %6 : vector<256x256xf32>
    %9 = vector.broadcast %5 : vector<1x256xf32> to vector<256x256xf32>
    %10 = arith.subf %9, %8 : vector<256x256xf32>
    %cst_9 = arith.constant dense<0.000000e+00> : vector<256xf32>
    %11 = vector.multi_reduction <add>, %10, %cst_9 [1] : vector<256x256xf32> to vector<256xf32>
    %12 = vector.shape_cast %11 : vector<256xf32> to vector<256x1xf32>
    %cst_10 = arith.constant 3.906250e-03 : f32
    %13 = vector.broadcast %cst_10 : f32 to vector<256x1xf32>
    %14 = arith.mulf %12, %13 : vector<256x1xf32>
    %15 = vector.broadcast %14 : vector<256x1xf32> to vector<256x256xf32>
    %16 = arith.subf %10, %15 : vector<256x256xf32>
    %17 = arith.mulf %16, %16 : vector<256x256xf32>
    %cst_11 = arith.constant dense<0.000000e+00> : vector<256xf32>
    %18 = vector.multi_reduction <add>, %17, %cst_11 [1] : vector<256x256xf32> to vector<256xf32>
    %19 = vector.shape_cast %18 : vector<256xf32> to vector<256x1xf32>
    %cst_12 = arith.constant 0.00392156886 : f32
    %20 = vector.broadcast %cst_12 : f32 to vector<256x1xf32>
    %21 = arith.mulf %19, %20 : vector<256x1xf32>
    %22 = math.sqrt %21 : vector<256x1xf32>
    %cst_13 = arith.constant 9.99999997E-7 : f32
    %23 = vector.broadcast %cst_13 : f32 to vector<256x1xf32>
    %24 = arith.addf %22, %23 : vector<256x1xf32>
    %25 = tpu.reciprocal %24 {approx = true} : vector<256x1xf32> -> vector<256x1xf32>
    %26 = vector.broadcast %25 : vector<256x1xf32> to vector<256x256xf32>
    %27 = arith.mulf %16, %26 : vector<256x256xf32>
    %28 = math.tanh %27 : vector<256x256xf32>
    %cst_14 = arith.constant -1.000000e-01 : f32
    %29 = vector.broadcast %cst_14 : f32 to vector<256x256xf32>
    %30 = arith.mulf %29, %28 : vector<256x256xf32>
    %31 = math.exp %30 : vector<256x256xf32>
    %cst_15 = arith.constant dense<0.000000e+00> : vector<256xf32>
    %32 = vector.multi_reduction <add>, %31, %cst_15 [1] : vector<256x256xf32> to vector<256xf32>
    %33 = vector.shape_cast %32 : vector<256xf32> to vector<256x1xf32>
    %34 = tpu.reciprocal %33 {approx = true} : vector<256x1xf32> -> vector<256x1xf32>
    %35 = vector.broadcast %34 : vector<256x1xf32> to vector<256x256xf32>
    %36 = arith.mulf %31, %35 : vector<256x256xf32>
    %37 = arith.truncf %36 : vector<256x256xf32> to vector<256x256xbf16>
    %cst_16 = arith.constant dense<0.000000e+00> : vector<256x128xf32>
    %38 = tpu.matmul %37, %3, %cst_16 {dimension_numbers = #tpu.dot_dimension_numbers<[1], [0], [0], [1], [0, 0, 1, 1], [], []>} : vector<256x256xbf16>, vector<256x128xbf16>, vector<256x128xf32> -> vector<256x128xf32>
    %c0_17 = arith.constant 0 : index
    %c0_18 = arith.constant 0 : index
    %c0_19 = arith.constant 0 : index
    %39 = vector.load %arg5[%c0_17, %c0_18, %c0_19] : memref<1x256x128xf32, #tpu.memory_space<vmem>>, vector<1x256x128xf32>
    %40 = vector.shape_cast %39 : vector<1x256x128xf32> to vector<256x128xf32>
    %41 = vector.shape_cast %38 : vector<256x128xf32> to vector<1x256x128xf32>
    tpu.vector_store %arg5[%c0_17, %c0_18, %c0_19], %41 {strides = array<i32>} : memref<1x256x128xf32, #tpu.memory_space<vmem>>, vector<1x256x128xf32>,
    return
  }
  func.func @transform_0(%arg0: i32, %arg1: i32) -> (i32, i32, i32) {
    %c0_i32 = arith.constant 0 : i32
    %c0_i32_0 = arith.constant 0 : i32
    return %arg0, %arg1, %c0_i32 : i32, i32, i32
  }
  func.func @transform_1(%arg0: i32, %arg1: i32) -> (i32, i32, i32) {
    %c0_i32 = arith.constant 0 : i32
    %c0_i32_0 = arith.constant 0 : i32
    %c0_i32_1 = arith.constant 0 : i32
    return %arg0, %c0_i32, %c0_i32_0 : i32, i32, i32
  }
  func.func @transform_2(%arg0: i32, %arg1: i32) -> (i32, i32, i32) {
    %c0_i32 = arith.constant 0 : i32
    %c0_i32_0 = arith.constant 0 : i32
    %c0_i32_1 = arith.constant 0 : i32
    return %arg0, %c0_i32, %c0_i32_0 : i32, i32, i32
  }
  func.func @transform_3(%arg0: i32, %arg1: i32) -> (i32, i32, i32) {
    %c0_i32 = arith.constant 0 : i32
    %c0_i32_0 = arith.constant 0 : i32
    return %arg0, %arg1, %c0_i32 : i32, i32, i32
  }
}

</mosaic_0001>

<llo_original>
// kernel: contextual_block_tf_style.1
$region0: #{contextual_block_tf_style.1}
  #allocation0 [shape = 'u32[]', space=smem, size = 0x4, offset = 0x4, fixed_abs, tag = 'smem constant byte address 0x4 - core index']
  #allocation1 [shape = 'u32[144,128]{1,0:T(1,128)}', space=vmem, size = 0x12000, scoped, tag = 'internal scratch']
  %s0 = inlined_call_operand.vmem [shape: bf16[2,256,128], index: 0, kind: input, shape index: {}]
  %s1 = inlined_call_operand.vmem [shape: bf16[2,256,128], index: 1, kind: input, shape index: {}]
  %s2 = inlined_call_operand.vmem [shape: f32[2,1,256], index: 2, kind: input, shape index: {}]
  %s3 = inlined_call_operand.vmem [shape: f32[2,256,128], index: 3, kind: output, shape index: {}]
  %s4 = sld [smem:[#allocation0]]
  $region45: #{contextual_block_tf_style.1} parent=0
    _
  %s6 = ssub.s32 1, %s4
  %s7 = scalar_select 0, %s6, %s4
  loop: start=0, step=1, limit=4
  $region2: #{contextual_block_tf_style.1} parent=0 // loop_pre_header
    _
  $region3: #{contextual_block_tf_style.1} parent=0 // loop_header
    %s9 = sphi 0, %s13
    %p10 = scmp.ge.s32.totalorder %s9, 4
    %s16 = sphi 0, %s28
    %s17 = sphi 0, %s24
    %s18 = sphi 0, %s16
    %s19 = sphi 0, %s17
    %s20 = sphi 0, %s18
    %s21 = sphi 0, %s19
    %s33 = sphi 0, %s35
    %s36 = sphi 0, %s33
    %s37 = sphi 0, %s36
    %s53 = sphi 0, %s37
    %s59 = sphi 0, %s61
    %s62 = sphi 0, %s59
    %s63 = sphi 0, %s62
    %s79 = sphi 0, %s63
    %s85 = sphi 0, %s87
    %s88 = sphi 0, %s85
    %s89 = sphi 0, %s88
    %s105 = sphi 0, %s89
    %s113 = sphi 0, %s115
    %s116 = sphi 0, %s113
    %s117 = sphi 0, %s116
    %s133 = sphi 0, %s117
  $region4: #{contextual_block_tf_style.1} parent=0 // loop_header_branch
    %12 = sbr.rel (%p10) target = $region8
  $region5: #{contextual_block_tf_style.1} parent=0 // loop_body
    %s14 = ssub.s32 %s9, 1
    %s15 = ssub.s32 %s9, 2
    %s22 = sadd.s32 1, %s17
    %p23 = scmp.ge.s32.totalorder %s22, 1
    %s24 = scalar_select %p23, 0, %s22
    %s25 = sadd.s32 1, %s16
    %s26 = scalar_select %p23, %s25, %s16
    %p27 = scmp.ge.s32.totalorder %s26, 2
    %s28 = scalar_select %p27, 0, %s26
    %s29 = ssub.s32 %s16, %s28
    %s30 = ssub.s32 %s17, %s24
    %s31 = sor.u32 %s29, %s30
    %p32 = scmp.eq.s32.totalorder %s31, 0
    %s34 = sadd.s32 %s33, 1
    %s35 = scalar_select %p32, %s33, %s34
    %p38 = pneg %p32
    %p39 = scmp.eq.s32.totalorder %s9, 1
    %p40 = por %p38, %p39
    %p41 = scmp.ne.s32.totalorder %s33, %s36
    %p42 = scmp.eq.s32.totalorder %s9, 0
    %p43 = por %p41, %p42
    %p44 = scmp.ne.s32.totalorder %s33, %s36
    %p45 = scmp.eq.s32.totalorder %s14, 1
    %p46 = por %p44, %p45
    %p47 = scmp.ne.s32.totalorder %s36, %s37
    %p48 = scmp.eq.s32.totalorder %s14, 0
    %p49 = por %p47, %p48
    %p50 = scmp.ne.s32.totalorder %s36, %s37
    %p51 = scmp.eq.s32.totalorder %s15, 1
    %p52 = por %p50, %p51
    %p54 = scmp.ne.s32.totalorder %s37, %s53
    %p55 = scmp.eq.s32.totalorder %s15, 0
    %p56 = por %p54, %p55
    %s57 = ssub.s32 %s16, %s28
    %p58 = scmp.eq.s32.totalorder %s57, 0
    %s60 = sadd.s32 %s59, 1
    %s61 = scalar_select %p58, %s59, %s60
    %p64 = pneg %p58
    %p65 = scmp.eq.s32.totalorder %s9, 1
    %p66 = por %p64, %p65
    %p67 = scmp.ne.s32.totalorder %s59, %s62
    %p68 = scmp.eq.s32.totalorder %s9, 0
    %p69 = por %p67, %p68
    %p70 = scmp.ne.s32.totalorder %s59, %s62
    %p71 = scmp.eq.s32.totalorder %s14, 1
    %p72 = por %p70, %p71
    %p73 = scmp.ne.s32.totalorder %s62, %s63
    %p74 = scmp.eq.s32.totalorder %s14, 0
    %p75 = por %p73, %p74
    %p76 = scmp.ne.s32.totalorder %s62, %s63
    %p77 = scmp.eq.s32.totalorder %s15, 1
    %p78 = por %p76, %p77
    %p80 = scmp.ne.s32.totalorder %s63, %s79
    %p81 = scmp.eq.s32.totalorder %s15, 0
    %p82 = por %p80, %p81
    %s83 = ssub.s32 %s16, %s28
    %p84 = scmp.eq.s32.totalorder %s83, 0
    %s86 = sadd.s32 %s85, 1
    %s87 = scalar_select %p84, %s85, %s86
    %p90 = pneg %p84
    %p91 = scmp.eq.s32.totalorder %s9, 1
    %p92 = por %p90, %p91
    %p93 = scmp.ne.s32.totalorder %s85, %s88
    %p94 = scmp.eq.s32.totalorder %s9, 0
    %p95 = por %p93, %p94
    %p96 = scmp.ne.s32.totalorder %s85, %s88
    %p97 = scmp.eq.s32.totalorder %s14, 1
    %p98 = por %p96, %p97
    %p99 = scmp.ne.s32.totalorder %s88, %s89
    %p100 = scmp.eq.s32.totalorder %s14, 0
    %p101 = por %p99, %p100
    %p102 = scmp.ne.s32.totalorder %s88, %s89
    %p103 = scmp.eq.s32.totalorder %s15, 1
    %p104 = por %p102, %p103
    %p106 = scmp.ne.s32.totalorder %s89, %s105
    %p107 = scmp.eq.s32.totalorder %s15, 0
    %p108 = por %p106, %p107
    %s109 = ssub.s32 %s16, %s28
    %s110 = ssub.s32 %s17, %s24
    %s111 = sor.u32 %s109, %s110
    %p112 = scmp.eq.s32.totalorder %s111, 0
    %s114 = sadd.s32 %s113, 1
    %s115 = scalar_select %p112, %s113, %s114
    %p118 = pneg %p112
    %p119 = scmp.eq.s32.totalorder %s9, 1
    %p120 = por %p118, %p119
    %p121 = scmp.ne.s32.totalorder %s113, %s116
    %p122 = scmp.eq.s32.totalorder %s9, 0
    %p123 = por %p121, %p122
    %p124 = scmp.ne.s32.totalorder %s113, %s116
    %p125 = scmp.eq.s32.totalorder %s14, 1
    %p126 = por %p124, %p125
    %p127 = scmp.ne.s32.totalorder %s116, %s117
    %p128 = scmp.eq.s32.totalorder %s14, 0
    %p129 = por %p127, %p128
    %p130 = scmp.ne.s32.totalorder %s116, %s117
    %p131 = scmp.eq.s32.totalorder %s15, 1
    %p132 = por %p130, %p131
    %p134 = scmp.ne.s32.totalorder %s117, %s133
    %p135 = scmp.eq.s32.totalorder %s15, 0
    %p136 = por %p134, %p135
    %p137 = scmp.le.s32.totalorder 1, %s9
    %p138 = scmp.lt.s32.totalorder %s9, 3
    %p139 = pnand %p137, %p138
    %p140 = pneg %p139
    // Predicated region
    $region9: #{contextual_block_tf_style.1} parent=5 // pred_check
      _
    $region10: #{contextual_block_tf_style.1} parent=5 // pred_check_branch
      %142 = sbr.rel (%p139) target = $region12
    $region11: #{contextual_block_tf_style.1} parent=5 // pred_region
      %s143 = ssub.s32 %s9, 1
    $region12: #{contextual_block_tf_style.1} parent=5 // pred_fallthru
      _
    %p144 = scmp.lt.s32.totalorder %s9, 2
    // Predicated region
    $region13: #{contextual_block_tf_style.1} parent=5 // pred_check
      %p145 = pneg %p144
    $region14: #{contextual_block_tf_style.1} parent=5 // pred_check_branch
      %147 = sbr.rel (%p145) target = $region16
    $region15: #{contextual_block_tf_style.1} parent=5 // pred_region
      // Predicated region
      $region17: #{contextual_block_tf_style.1} parent=15 // pred_check
        %p148 = pneg %p43
      $region18: #{contextual_block_tf_style.1} parent=15 // pred_check_branch
        %150 = sbr.rel (%p148) target = $region20
      $region19: #{contextual_block_tf_style.1} parent=15 // pred_region
        %s151 = smul.u32 32, %s17
        %p152 = scmp.lt.s32.totalorder %s16, 1
        %s153 = scalar_select %p152, %s16, 1
        %p154 = scmp.lt.s32.totalorder %s151, 31
        %s155 = scalar_select %p154, %s151, 31
        %s156 = smul.addr %s153, 32
        %s157 = sadd.s32 %s155, %s156
        %s158 = smul.addr %s157, 4
        %s159 = scalar_lea.vmem %s0, %s158
        %s160 = smul.u32 32, %s17
      $region20: #{contextual_block_tf_style.1} parent=15 // pred_fallthru
        _
      // Predicated region
      $region21: #{contextual_block_tf_style.1} parent=15 // pred_check
        %p161 = pneg %p69
      $region22: #{contextual_block_tf_style.1} parent=15 // pred_check_branch
        %163 = sbr.rel (%p161) target = $region24
      $region23: #{contextual_block_tf_style.1} parent=15 // pred_region
        %p164 = scmp.lt.s32.totalorder %s16, 1
        %s165 = scalar_select %p164, %s16, 1
        %s166 = smul.addr %s165, 32
        %s167 = smul.addr %s166, 4
        %s168 = scalar_lea.vmem %s1, %s167
      $region24: #{contextual_block_tf_style.1} parent=15 // pred_fallthru
        _
      // Predicated region
      $region25: #{contextual_block_tf_style.1} parent=15 // pred_check
        %p169 = pneg %p95
      $region26: #{contextual_block_tf_style.1} parent=15 // pred_check_branch
        %171 = sbr.rel (%p169) target = $region28
      $region27: #{contextual_block_tf_style.1} parent=15 // pred_region
        %p172 = scmp.lt.s32.totalorder %s16, 1
        %s173 = scalar_select %p172, %s16, 1
        %s174 = smul.addr %s173, 2
        %s175 = scalar_lea.vmem %s2, %s174
      $region28: #{contextual_block_tf_style.1} parent=15 // pred_fallthru
        _
    $region16: #{contextual_block_tf_style.1} parent=5 // pred_fallthru
      _
    %p176 = scmp.le.s32.totalorder 1, %s9
    %p177 = scmp.lt.s32.totalorder %s9, 3
    %p178 = pnand %p176, %p177
    %p179 = pneg %p178
    // Predicated region
    $region29: #{contextual_block_tf_style.1} parent=5 // pred_check
      _
    $region30: #{contextual_block_tf_style.1} parent=5 // pred_check_branch
      %181 = sbr.rel (%p178) target = $region32
    $region31: #{contextual_block_tf_style.1} parent=5 // pred_region
      %s182 = ssub.s32 %s9, 1
      %s183 = smul.u32 32, %s19
      %p184 = scmp.lt.s32.totalorder %s18, 1
      %s185 = scalar_select %p184, %s18, 1
      %p186 = scmp.lt.s32.totalorder %s183, 31
      %s187 = scalar_select %p186, %s183, 31
      %s188 = smul.addr %s185, 32
      %s189 = sadd.s32 %s187, %s188
      %s190 = smul.addr %s189, 4
      %s191 = scalar_lea.vmem %s0, %s190
      %p192 = pneg %p49
      %p193 = pneg %p46
      %p194 = scmp.lt.s32.totalorder %s18, 1
      %s195 = scalar_select %p194, %s18, 1
      %s196 = smul.addr %s195, 32
      %s197 = smul.addr %s196, 4
      %s198 = scalar_lea.vmem %s1, %s197
      %p199 = pneg %p75
      %p200 = pneg %p72
      %p201 = scmp.lt.s32.totalorder %s18, 1
      %s202 = scalar_select %p201, %s18, 1
      %s203 = smul.addr %s202, 2
      %s204 = scalar_lea.vmem %s2, %s203
      %p205 = pneg %p101
      %p206 = pneg %p98
      %p207 = pneg %p129
      %p208 = pneg %p126
      %s209 = smul.u32 32, %s19
      %p210 = scmp.lt.s32.totalorder %s18, 1
      %s211 = scalar_select %p210, %s18, 1
      %p212 = scmp.lt.s32.totalorder %s209, 31
      %s213 = scalar_select %p212, %s209, 31
      %s214 = smul.addr %s211, 32
      %s215 = sadd.s32 %s213, %s214
      %s216 = smul.addr %s215, 8
      %s217 = scalar_lea.vmem %s3, %s216
      %s218 = smul.u32 32, %s19
      %p219 = scmp.lt.s32.totalorder %s18, 1
      %s220 = scalar_select %p219, %s18, 1
      %p221 = scmp.lt.s32.totalorder %s218, 31
      %s222 = scalar_select %p221, %s218, 31
      %s223 = smul.addr %s220, 32
      %s224 = sadd.s32 %s222, %s223
      %s225 = smul.addr %s224, 4
      %s226 = scalar_lea.vmem %s0, %s225
      %s227 = smul.u32 32, %s19
      %p228 = scmp.lt.s32.totalorder %s18, 1
      %s229 = scalar_select %p228, %s18, 1
      %s230 = smul.addr %s229, 32
      %s231 = smul.addr %s230, 4
      %s232 = scalar_lea.vmem %s1, %s231
      %p233 = scmp.lt.s32.totalorder %s18, 1
      %s234 = scalar_select %p233, %s18, 1
      %s235 = smul.addr %s234, 2
      %s236 = scalar_lea.vmem %s2, %s235
      %s237 = smul.u32 32, %s19
      %p238 = scmp.lt.s32.totalorder %s18, 1
      %s239 = scalar_select %p238, %s18, 1
      %p240 = scmp.lt.s32.totalorder %s237, 31
      %s241 = scalar_select %p240, %s237, 31
      %s242 = smul.addr %s239, 32
      %s243 = sadd.s32 %s241, %s242
      %s244 = smul.addr %s243, 8
      %s245 = scalar_lea.vmem %s3, %s244
      %s246 = smul.u32 32, %s19
      %v248 = vld [vmem:[%s226] sm:$0xf]
      %v249 = vld [vmem:[%s226 + $0x4] sm:$0xf]
      %v250 = vld [vmem:[%s226 + $0x8] sm:$0xf]
      %v251 = vld [vmem:[%s226 + $0xc] sm:$0xf]
      %v252 = vld [vmem:[%s226 + $0x10] sm:$0xf]
      %v253 = vld [vmem:[%s226 + $0x14] sm:$0xf]
      %v254 = vld [vmem:[%s226 + $0x18] sm:$0xf]
      %v255 = vld [vmem:[%s226 + $0x1c] sm:$0xf]
      %v256 = vld [vmem:[%s226 + $0x20] sm:$0xf]
      %v257 = vld [vmem:[%s226 + $0x24] sm:$0xf]
      %v258 = vld [vmem:[%s226 + $0x28] sm:$0xf]
      %v259 = vld [vmem:[%s226 + $0x2c] sm:$0xf]
      %v260 = vld [vmem:[%s226 + $0x30] sm:$0xf]
      %v261 = vld [vmem:[%s226 + $0x34] sm:$0xf]
      %v262 = vld [vmem:[%s226 + $0x38] sm:$0xf]
      %v263 = vld [vmem:[%s226 + $0x3c] sm:$0xf]
      %v264 = vld [vmem:[%s226 + $0x40] sm:$0xf]
      %v265 = vld [vmem:[%s226 + $0x44] sm:$0xf]
      %v266 = vld [vmem:[%s226 + $0x48] sm:$0xf]
      %v267 = vld [vmem:[%s226 + $0x4c] sm:$0xf]
      %v268 = vld [vmem:[%s226 + $0x50] sm:$0xf]
      %v269 = vld [vmem:[%s226 + $0x54] sm:$0xf]
      %v270 = vld [vmem:[%s226 + $0x58] sm:$0xf]
      %v271 = vld [vmem:[%s226 + $0x5c] sm:$0xf]
      %v272 = vld [vmem:[%s226 + $0x60] sm:$0xf]
      %v273 = vld [vmem:[%s226 + $0x64] sm:$0xf]
      %v274 = vld [vmem:[%s226 + $0x68] sm:$0xf]
      %v275 = vld [vmem:[%s226 + $0x6c] sm:$0xf]
      %v276 = vld [vmem:[%s226 + $0x70] sm:$0xf]
      %v277 = vld [vmem:[%s226 + $0x74] sm:$0xf]
      %v278 = vld [vmem:[%s226 + $0x78] sm:$0xf]
      %v279 = vld [vmem:[%s226 + $0x7c] sm:$0xf]
      %v280 = vld [vmem:[%s232] sm:$0xf]
      %v281 = vld [vmem:[%s232 + $0x4] sm:$0xf]
      %v282 = vld [vmem:[%s232 + $0x8] sm:$0xf]
      %v283 = vld [vmem:[%s232 + $0xc] sm:$0xf]
      %v284 = vld [vmem:[%s232 + $0x10] sm:$0xf]
      %v285 = vld [vmem:[%s232 + $0x14] sm:$0xf]
      %v286 = vld [vmem:[%s232 + $0x18] sm:$0xf]
      %v287 = vld [vmem:[%s232 + $0x1c] sm:$0xf]
      %v288 = vld [vmem:[%s232 + $0x20] sm:$0xf]
      %v289 = vld [vmem:[%s232 + $0x24] sm:$0xf]
      %v290 = vld [vmem:[%s232 + $0x28] sm:$0xf]
      %v291 = vld [vmem:[%s232 + $0x2c] sm:$0xf]
      %v292 = vld [vmem:[%s232 + $0x30] sm:$0xf]
      %v293 = vld [vmem:[%s232 + $0x34] sm:$0xf]
      %v294 = vld [vmem:[%s232 + $0x38] sm:$0xf]
      %v295 = vld [vmem:[%s232 + $0x3c] sm:$0xf]
      %v296 = vld [vmem:[%s232 + $0x40] sm:$0xf]
      %v297 = vld [vmem:[%s232 + $0x44] sm:$0xf]
      %v298 = vld [vmem:[%s232 + $0x48] sm:$0xf]
      %v299 = vld [vmem:[%s232 + $0x4c] sm:$0xf]
      %v300 = vld [vmem:[%s232 + $0x50] sm:$0xf]
      %v301 = vld [vmem:[%s232 + $0x54] sm:$0xf]
      %v302 = vld [vmem:[%s232 + $0x58] sm:$0xf]
      %v303 = vld [vmem:[%s232 + $0x5c] sm:$0xf]
      %v304 = vld [vmem:[%s232 + $0x60] sm:$0xf]
      %v305 = vld [vmem:[%s232 + $0x64] sm:$0xf]
      %v306 = vld [vmem:[%s232 + $0x68] sm:$0xf]
      %v307 = vld [vmem:[%s232 + $0x6c] sm:$0xf]
      %v308 = vld [vmem:[%s232 + $0x70] sm:$0xf]
      %v309 = vld [vmem:[%s232 + $0x74] sm:$0xf]
      %v310 = vld [vmem:[%s232 + $0x78] sm:$0xf]
      %v311 = vld [vmem:[%s232 + $0x7c] sm:$0xf]
      %v312 = vld [vmem:[%s236] sm:$0x3]
      %v345 = vunpack.c.l.b16 %v248
      %v346 = vunpack.c.l.b16 %v249
      %v347 = vunpack.c.l.b16 %v250
      %v348 = vunpack.c.l.b16 %v251
      %v349 = vunpack.c.l.b16 %v252
      %v350 = vunpack.c.l.b16 %v253
      %v351 = vunpack.c.l.b16 %v254
      %v352 = vunpack.c.l.b16 %v255
      %v353 = vunpack.c.l.b16 %v256
      %v354 = vunpack.c.l.b16 %v257
      %v355 = vunpack.c.l.b16 %v258
      %v356 = vunpack.c.l.b16 %v259
      %v357 = vunpack.c.l.b16 %v260
      %v358 = vunpack.c.l.b16 %v261
      %v359 = vunpack.c.l.b16 %v262
      %v360 = vunpack.c.l.b16 %v263
      %v361 = vunpack.c.l.b16 %v264
      %v362 = vunpack.c.l.b16 %v265
      %v363 = vunpack.c.l.b16 %v266
      %v364 = vunpack.c.l.b16 %v267
      %v365 = vunpack.c.l.b16 %v268
      %v366 = vunpack.c.l.b16 %v269
      %v367 = vunpack.c.l.b16 %v270
      %v368 = vunpack.c.l.b16 %v271
      %v369 = vunpack.c.l.b16 %v272
      %v370 = vunpack.c.l.b16 %v273
      %v371 = vunpack.c.l.b16 %v274
      %v372 = vunpack.c.l.b16 %v275
      %v373 = vunpack.c.l.b16 %v276
      %v374 = vunpack.c.l.b16 %v277
      %v375 = vunpack.c.l.b16 %v278
      %v376 = vunpack.c.l.b16 %v279
      %v377 = vpack.c.b16 %v346, %v345
      %v378 = vpack.c.b16 %v348, %v347
      %v379 = vpack.c.b16 %v350, %v349
      %v380 = vpack.c.b16 %v352, %v351
      %v381 = vpack.c.b16 %v354, %v353
      %v382 = vpack.c.b16 %v356, %v355
      %v383 = vpack.c.b16 %v358, %v357
      %v384 = vpack.c.b16 %v360, %v359
      %v385 = vpack.c.b16 %v362, %v361
      %v386 = vpack.c.b16 %v364, %v363
      %v387 = vpack.c.b16 %v366, %v365
      %v388 = vpack.c.b16 %v368, %v367
      %v389 = vpack.c.b16 %v370, %v369
      %v390 = vpack.c.b16 %v372, %v371
      %v391 = vpack.c.b16 %v374, %v373
      %v392 = vpack.c.b16 %v376, %v375
      %v441 = vunpack.c.l.b16 %v280
      %v442 = vunpack.c.l.b16 %v281
      %v443 = vunpack.c.l.b16 %v282
      %v444 = vunpack.c.l.b16 %v283
      %v445 = vunpack.c.l.b16 %v284
      %v446 = vunpack.c.l.b16 %v285
      %v447 = vunpack.c.l.b16 %v286
      %v448 = vunpack.c.l.b16 %v287
      %v449 = vunpack.c.l.b16 %v288
      %v450 = vunpack.c.l.b16 %v289
      %v451 = vunpack.c.l.b16 %v290
      %v452 = vunpack.c.l.b16 %v291
      %v453 = vunpack.c.l.b16 %v292
      %v454 = vunpack.c.l.b16 %v293
      %v455 = vunpack.c.l.b16 %v294
      %v456 = vunpack.c.l.b16 %v295
      %v457 = vunpack.c.l.b16 %v296
      %v458 = vunpack.c.l.b16 %v297
      %v459 = vunpack.c.l.b16 %v298
      %v460 = vunpack.c.l.b16 %v299
      %v461 = vunpack.c.l.b16 %v300
      %v462 = vunpack.c.l.b16 %v301
      %v463 = vunpack.c.l.b16 %v302
      %v464 = vunpack.c.l.b16 %v303
      %v465 = vunpack.c.l.b16 %v304
      %v466 = vunpack.c.l.b16 %v305
      %v467 = vunpack.c.l.b16 %v306
      %v468 = vunpack.c.l.b16 %v307
      %v469 = vunpack.c.l.b16 %v308
      %v470 = vunpack.c.l.b16 %v309
      %v471 = vunpack.c.l.b16 %v310
      %v472 = vunpack.c.l.b16 %v311
      %v473 = vpack.c.b16 %v442, %v441
      %v474 = vpack.c.b16 %v444, %v443
      %v475 = vpack.c.b16 %v446, %v445
      %v476 = vpack.c.b16 %v448, %v447
      %v477 = vpack.c.b16 %v450, %v449
      %v478 = vpack.c.b16 %v452, %v451
      %v479 = vpack.c.b16 %v454, %v453
      %v480 = vpack.c.b16 %v456, %v455
      %v481 = vpack.c.b16 %v458, %v457
      %v482 = vpack.c.b16 %v460, %v459
      %v483 = vpack.c.b16 %v462, %v461
      %v484 = vpack.c.b16 %v464, %v463
      %v485 = vpack.c.b16 %v466, %v465
      %v486 = vpack.c.b16 %v468, %v467
      %v487 = vpack.c.b16 %v470, %v469
      %v488 = vpack.c.b16 %v472, %v471
      %505 = vmatprep.subr.bf16.mxu0 0
      %506 = vmatpush1.bf16.xpose.msra.mxu0 %v473
      %507 = vmatprep.subr.bf16.mxu0 0
      %508 = vmatpush1.bf16.xpose.msra.mxu0 %v474
      %509 = vmatprep.subr.bf16.mxu0 0
      %510 = vmatpush1.bf16.xpose.msra.mxu0 %v475
      %511 = vmatprep.subr.bf16.mxu0 0
      %512 = vmatpush1.bf16.xpose.msra.mxu0 %v476
      %513 = vmatprep.subr.bf16.mxu0 0
      %514 = vmatpush1.bf16.xpose.msra.mxu0 %v477
      %515 = vmatprep.subr.bf16.mxu0 0
      %516 = vmatpush1.bf16.xpose.msra.mxu0 %v478
      %517 = vmatprep.subr.bf16.mxu0 0
      %518 = vmatpush1.bf16.xpose.msra.mxu0 %v479
      %519 = vmatprep.subr.bf16.mxu0 0
      %520 = vmatpush1.bf16.xpose.msra.mxu0 %v480
      %521 = vmatprep.subr.bf16.mxu0 0
      %522 = vmatpush1.bf16.xpose.msra.mxu0 %v481
      %523 = vmatprep.subr.bf16.mxu0 0
      %524 = vmatpush1.bf16.xpose.msra.mxu0 %v482
      %525 = vmatprep.subr.bf16.mxu0 0
      %526 = vmatpush1.bf16.xpose.msra.mxu0 %v483
      %527 = vmatprep.subr.bf16.mxu0 0
      %528 = vmatpush1.bf16.xpose.msra.mxu0 %v484
      %529 = vmatprep.subr.bf16.mxu0 0
      %530 = vmatpush1.bf16.xpose.msra.mxu0 %v485
      %531 = vmatprep.subr.bf16.mxu0 0
      %532 = vmatpush1.bf16.xpose.msra.mxu0 %v486
      %533 = vmatprep.subr.bf16.mxu0 0
      %534 = vmatpush1.bf16.xpose.msra.mxu0 %v487
      %535 = vmatprep.subr.bf16.mxu0 0
      %536 = vmatpush1.bf16.xpose.msra.mxu0 %v488
      %537 = vmatprep.mubr.bf16.mxu0 0
      %538 = vmatmul.mubr.bf16.gmra.mrb[0].mxu0 %v377
      %v539 = vpop.f32.mrb[0].mxu0
      %v540 = vadd.f32 0.0, %v539
      %v541 = vpop.f32.mrb[0].mxu0
      %v542 = vadd.f32 0.0, %v541
      %v543 = vpop.f32.mrb[0].mxu0
      %v544 = vadd.f32 0.0, %v543
      %v545 = vpop.f32.mrb[0].mxu0
      %v546 = vadd.f32 0.0, %v545
      %547 = vmatprep.mubr.bf16.mxu0 0
      %548 = vmatmul.mubr.bf16.gmra.mrb[0].mxu0 %v378
      %v549 = vpop.f32.mrb[0].mxu0
      %v550 = vadd.f32 0.0, %v549
      %v551 = vpop.f32.mrb[0].mxu0
      %v552 = vadd.f32 0.0, %v551
      %v553 = vpop.f32.mrb[0].mxu0
      %v554 = vadd.f32 0.0, %v553
      %v555 = vpop.f32.mrb[0].mxu0
      %v556 = vadd.f32 0.0, %v555
      %557 = vmatprep.mubr.bf16.mxu0 0
      %558 = vmatmul.mubr.bf16.gmra.mrb[0].mxu0 %v379
      %v559 = vpop.f32.mrb[0].mxu0
      %v560 = vadd.f32 0.0, %v559
      %v561 = vpop.f32.mrb[0].mxu0
      %v562 = vadd.f32 0.0, %v561
      %v563 = vpop.f32.mrb[0].mxu0
      %v564 = vadd.f32 0.0, %v563
      %v565 = vpop.f32.mrb[0].mxu0
      %v566 = vadd.f32 0.0, %v565
      %567 = vmatprep.mubr.bf16.mxu0 0
      %568 = vmatmul.mubr.bf16.gmra.mrb[0].mxu0 %v380
      %v569 = vpop.f32.mrb[0].mxu0
      %v570 = vadd.f32 0.0, %v569
      %v571 = vpop.f32.mrb[0].mxu0
      %v572 = vadd.f32 0.0, %v571
      %v573 = vpop.f32.mrb[0].mxu0
      %v574 = vadd.f32 0.0, %v573
      %v575 = vpop.f32.mrb[0].mxu0
      %v576 = vadd.f32 0.0, %v575
      %577 = vmatprep.mubr.bf16.mxu0 0
      %578 = vmatmul.mubr.bf16.gmra.mrb[0].mxu0 %v381
      %v579 = vpop.f32.mrb[0].mxu0
      %v580 = vadd.f32 0.0, %v579
      %v581 = vpop.f32.mrb[0].mxu0
      %v582 = vadd.f32 0.0, %v581
      %v583 = vpop.f32.mrb[0].mxu0
      %v584 = vadd.f32 0.0, %v583
      %v585 = vpop.f32.mrb[0].mxu0
      %v586 = vadd.f32 0.0, %v585
      %587 = vmatprep.mubr.bf16.mxu0 0
      %588 = vmatmul.mubr.bf16.gmra.mrb[0].mxu0 %v382
      %v589 = vpop.f32.mrb[0].mxu0
      %v590 = vadd.f32 0.0, %v589
      %v591 = vpop.f32.mrb[0].mxu0
      %v592 = vadd.f32 0.0, %v591
      %v593 = vpop.f32.mrb[0].mxu0
      %v594 = vadd.f32 0.0, %v593
      %v595 = vpop.f32.mrb[0].mxu0
      %v596 = vadd.f32 0.0, %v595
      %597 = vmatprep.mubr.bf16.mxu0 0
      %598 = vmatmul.mubr.bf16.gmra.mrb[0].mxu0 %v383
      %v599 = vpop.f32.mrb[0].mxu0
      %v600 = vadd.f32 0.0, %v599
      %v601 = vpop.f32.mrb[0].mxu0
      %v602 = vadd.f32 0.0, %v601
      %v603 = vpop.f32.mrb[0].mxu0
      %v604 = vadd.f32 0.0, %v603
      %v605 = vpop.f32.mrb[0].mxu0
      %v606 = vadd.f32 0.0, %v605
      %607 = vmatprep.mubr.bf16.mxu0 0
      %608 = vmatmul.mubr.bf16.gmra.mrb[0].mxu0 %v384
      %v609 = vpop.f32.mrb[0].mxu0
      %v610 = vadd.f32 0.0, %v609
      %v611 = vpop.f32.mrb[0].mxu0
      %v612 = vadd.f32 0.0, %v611
      %v613 = vpop.f32.mrb[0].mxu0
      %v614 = vadd.f32 0.0, %v613
      %v615 = vpop.f32.mrb[0].mxu0
      %v616 = vadd.f32 0.0, %v615
      %617 = vmatprep.mubr.bf16.mxu0 0
      %618 = vmatmul.mubr.bf16.gmra.mrb[0].mxu0 %v385
      %v619 = vpop.f32.mrb[0].mxu0
      %v620 = vadd.f32 0.0, %v619
      %v621 = vpop.f32.mrb[0].mxu0
      %v622 = vadd.f32 0.0, %v621
      %v623 = vpop.f32.mrb[0].mxu0
      %v624 = vadd.f32 0.0, %v623
      %v625 = vpop.f32.mrb[0].mxu0
      %v626 = vadd.f32 0.0, %v625
      %627 = vmatprep.mubr.bf16.mxu0 0
      %628 = vmatmul.mubr.bf16.gmra.mrb[0].mxu0 %v386
      %v629 = vpop.f32.mrb[0].mxu0
      %v630 = vadd.f32 0.0, %v629
      %v631 = vpop.f32.mrb[0].mxu0
      %v632 = vadd.f32 0.0, %v631
      %v633 = vpop.f32.mrb[0].mxu0
      %v634 = vadd.f32 0.0, %v633
      %v635 = vpop.f32.mrb[0].mxu0
      %v636 = vadd.f32 0.0, %v635
      %637 = vmatprep.mubr.bf16.mxu0 0
      %638 = vmatmul.mubr.bf16.gmra.mrb[0].mxu0 %v387
      %v639 = vpop.f32.mrb[0].mxu0
      %v640 = vadd.f32 0.0, %v639
      %v641 = vpop.f32.mrb[0].mxu0
      %v642 = vadd.f32 0.0, %v641
      %v643 = vpop.f32.mrb[0].mxu0
      %v644 = vadd.f32 0.0, %v643
      %v645 = vpop.f32.mrb[0].mxu0
      %v646 = vadd.f32 0.0, %v645
      %647 = vmatprep.mubr.bf16.mxu0 0
      %648 = vmatmul.mubr.bf16.gmra.mrb[0].mxu0 %v388
      %v649 = vpop.f32.mrb[0].mxu0
      %v650 = vadd.f32 0.0, %v649
      %v651 = vpop.f32.mrb[0].mxu0
      %v652 = vadd.f32 0.0, %v651
      %v653 = vpop.f32.mrb[0].mxu0
      %v654 = vadd.f32 0.0, %v653
      %v655 = vpop.f32.mrb[0].mxu0
      %v656 = vadd.f32 0.0, %v655
      %657 = vmatprep.mubr.bf16.mxu0 0
      %658 = vmatmul.mubr.bf16.gmra.mrb[0].mxu0 %v389
      %v659 = vpop.f32.mrb[0].mxu0
      %v660 = vadd.f32 0.0, %v659
      %v661 = vpop.f32.mrb[0].mxu0
      %v662 = vadd.f32 0.0, %v661
      %v663 = vpop.f32.mrb[0].mxu0
      %v664 = vadd.f32 0.0, %v663
      %v665 = vpop.f32.mrb[0].mxu0
      %v666 = vadd.f32 0.0, %v665
      %667 = vmatprep.mubr.bf16.mxu0 0
      %668 = vmatmul.mubr.bf16.gmra.mrb[0].mxu0 %v390
      %v669 = vpop.f32.mrb[0].mxu0
      %v670 = vadd.f32 0.0, %v669
      %v671 = vpop.f32.mrb[0].mxu0
      %v672 = vadd.f32 0.0, %v671
      %v673 = vpop.f32.mrb[0].mxu0
      %v674 = vadd.f32 0.0, %v673
      %v675 = vpop.f32.mrb[0].mxu0
      %v676 = vadd.f32 0.0, %v675
      %677 = vmatprep.mubr.bf16.mxu0 0
      %678 = vmatmul.mubr.bf16.gmra.mrb[0].mxu0 %v391
      %v679 = vpop.f32.mrb[0].mxu0
      %v680 = vadd.f32 0.0, %v679
      %v681 = vpop.f32.mrb[0].mxu0
      %v682 = vadd.f32 0.0, %v681
      %v683 = vpop.f32.mrb[0].mxu0
      %v684 = vadd.f32 0.0, %v683
      %v685 = vpop.f32.mrb[0].mxu0
      %v686 = vadd.f32 0.0, %v685
      %687 = vmatprep.mubr.bf16.mxu0 0
      %688 = vmatmul.mubr.bf16.gmra.mrb[0].mxu0 %v392
      %v689 = vpop.f32.mrb[0].mxu0
      %v690 = vadd.f32 0.0, %v689
      %v691 = vpop.f32.mrb[0].mxu0
      %v692 = vadd.f32 0.0, %v691
      %v693 = vpop.f32.mrb[0].mxu0
      %v694 = vadd.f32 0.0, %v693
      %v695 = vpop.f32.mrb[0].mxu0
      %v696 = vadd.f32 0.0, %v695
      %697 = vdwg.mxu0
      %v698 = vmul.f32 %v540, 2.0
      %v699 = vmul.f32 %v542, 2.0
      %v700 = vmul.f32 %v544, 2.0
      %v701 = vmul.f32 %v546, 2.0
      %v702 = vmul.f32 %v550, 2.0
      %v703 = vmul.f32 %v552, 2.0
      %v704 = vmul.f32 %v554, 2.0
      %v705 = vmul.f32 %v556, 2.0
      %v706 = vmul.f32 %v560, 2.0
      %v707 = vmul.f32 %v562, 2.0
      %v708 = vmul.f32 %v564, 2.0
      %v709 = vmul.f32 %v566, 2.0
      %v710 = vmul.f32 %v570, 2.0
      %v711 = vmul.f32 %v572, 2.0
      %v712 = vmul.f32 %v574, 2.0
      %v713 = vmul.f32 %v576, 2.0
      %v714 = vmul.f32 %v580, 2.0
      %v715 = vmul.f32 %v582, 2.0
      %v716 = vmul.f32 %v584, 2.0
      %v717 = vmul.f32 %v586, 2.0
      %v718 = vmul.f32 %v590, 2.0
      %v719 = vmul.f32 %v592, 2.0
      %v720 = vmul.f32 %v594, 2.0
      %v721 = vmul.f32 %v596, 2.0
      %v722 = vmul.f32 %v600, 2.0
      %v723 = vmul.f32 %v602, 2.0
      %v724 = vmul.f32 %v604, 2.0
      %v725 = vmul.f32 %v606, 2.0
      %v726 = vmul.f32 %v610, 2.0
      %v727 = vmul.f32 %v612, 2.0
      %v728 = vmul.f32 %v614, 2.0
      %v729 = vmul.f32 %v616, 2.0
      %v730 = vmul.f32 %v620, 2.0
      %v731 = vmul.f32 %v622, 2.0
      %v732 = vmul.f32 %v624, 2.0
      %v733 = vmul.f32 %v626, 2.0
      %v734 = vmul.f32 %v630, 2.0
      %v735 = vmul.f32 %v632, 2.0
      %v736 = vmul.f32 %v634, 2.0
      %v737 = vmul.f32 %v636, 2.0
      %v738 = vmul.f32 %v640, 2.0
      %v739 = vmul.f32 %v642, 2.0
      %v740 = vmul.f32 %v644, 2.0
      %v741 = vmul.f32 %v646, 2.0
      %v742 = vmul.f32 %v650, 2.0
      %v743 = vmul.f32 %v652, 2.0
      %v744 = vmul.f32 %v654, 2.0
      %v745 = vmul.f32 %v656, 2.0
      %v746 = vmul.f32 %v660, 2.0
      %v747 = vmul.f32 %v662, 2.0
      %v748 = vmul.f32 %v664, 2.0
      %v749 = vmul.f32 %v666, 2.0
      %v750 = vmul.f32 %v670, 2.0
      %v751 = vmul.f32 %v672, 2.0
      %v752 = vmul.f32 %v674, 2.0
      %v753 = vmul.f32 %v676, 2.0
      %v754 = vmul.f32 %v680, 2.0
      %v755 = vmul.f32 %v682, 2.0
      %v756 = vmul.f32 %v684, 2.0
      %v757 = vmul.f32 %v686, 2.0
      %v758 = vmul.f32 %v690, 2.0
      %v759 = vmul.f32 %v692, 2.0
      %v760 = vmul.f32 %v694, 2.0
      %v761 = vmul.f32 %v696, 2.0
      %v763 = vlaneseq
      %v764 = vshrl.u32 %v763, 7
      %v765 = vsub.s32 0, %v764
      %v766 = vrot.slane %v312, %v765
      %v767 = vlaneseq
      %v768 = vshrl.u32 %v767, 7
      %v769 = vsub.s32 1, %v768
      %v770 = vrot.slane %v312, %v769
      %v773 = vsub.f32 %v766, %v698
      %v774 = vsub.f32 %v770, %v699
      %v775 = vsub.f32 %v766, %v700
      %v776 = vsub.f32 %v770, %v701
      %v777 = vsub.f32 %v766, %v702
      %v778 = vsub.f32 %v770, %v703
      %v779 = vsub.f32 %v766, %v704
      %v780 = vsub.f32 %v770, %v705
      %v781 = vsub.f32 %v766, %v706
      %v782 = vsub.f32 %v770, %v707
      %v783 = vsub.f32 %v766, %v708
      %v784 = vsub.f32 %v770, %v709
      %v785 = vsub.f32 %v766, %v710
      %v786 = vsub.f32 %v770, %v711
      %v787 = vsub.f32 %v766, %v712
      %v788 = vsub.f32 %v770, %v713
      %v789 = vsub.f32 %v766, %v714
      %v790 = vsub.f32 %v770, %v715
      %v791 = vsub.f32 %v766, %v716
      %v792 = vsub.f32 %v770, %v717
      %v793 = vsub.f32 %v766, %v718
      %v794 = vsub.f32 %v770, %v719
      %v795 = vsub.f32 %v766, %v720
      %v796 = vsub.f32 %v770, %v721
      %v797 = vsub.f32 %v766, %v722
      %v798 = vsub.f32 %v770, %v723
      %v799 = vsub.f32 %v766, %v724
      %v800 = vsub.f32 %v770, %v725
      %v801 = vsub.f32 %v766, %v726
      %v802 = vsub.f32 %v770, %v727
      %v803 = vsub.f32 %v766, %v728
      %v804 = vsub.f32 %v770, %v729
      %v805 = vsub.f32 %v766, %v730
      %v806 = vsub.f32 %v770, %v731
      %v807 = vsub.f32 %v766, %v732
      %v808 = vsub.f32 %v770, %v733
      %v809 = vsub.f32 %v766, %v734
      %v810 = vsub.f32 %v770, %v735
      %v811 = vsub.f32 %v766, %v736
      %v812 = vsub.f32 %v770, %v737
      %v813 = vsub.f32 %v766, %v738
      %v814 = vsub.f32 %v770, %v739
      %v815 = vsub.f32 %v766, %v740
      %v816 = vsub.f32 %v770, %v741
      %v817 = vsub.f32 %v766, %v742
      %v818 = vsub.f32 %v770, %v743
      %v819 = vsub.f32 %v766, %v744
      %v820 = vsub.f32 %v770, %v745
      %v821 = vsub.f32 %v766, %v746
      %v822 = vsub.f32 %v770, %v747
      %v823 = vsub.f32 %v766, %v748
      %v824 = vsub.f32 %v770, %v749
      %v825 = vsub.f32 %v766, %v750
      %v826 = vsub.f32 %v770, %v751
      %v827 = vsub.f32 %v766, %v752
      %v828 = vsub.f32 %v770, %v753
      %v829 = vsub.f32 %v766, %v754
      %v830 = vsub.f32 %v770, %v755
      %v831 = vsub.f32 %v766, %v756
      %v832 = vsub.f32 %v770, %v757
      %v833 = vsub.f32 %v766, %v758
      %v834 = vsub.f32 %v770, %v759
      %v835 = vsub.f32 %v766, %v760
      %v836 = vsub.f32 %v770, %v761
      %v837 = vadd.f32 %v773, %v774
      %838 = vadd.xlane.f32.xlu0 %v837
      %v839 = vpop.xlane.xlu0 %838
      %v840 = vadd.f32 %v775, %v776
      %841 = vadd.xlane.f32.xlu0 %v840
      %v842 = vpop.xlane.xlu0 %841
      %v843 = vadd.f32 %v777, %v778
      %844 = vadd.xlane.f32.xlu0 %v843
      %v845 = vpop.xlane.xlu0 %844
      %v846 = vadd.f32 %v779, %v780
      %847 = vadd.xlane.f32.xlu0 %v846
      %v848 = vpop.xlane.xlu0 %847
      %v849 = vadd.f32 %v781, %v782
      %850 = vadd.xlane.f32.xlu0 %v849
      %v851 = vpop.xlane.xlu0 %850
      %v852 = vadd.f32 %v783, %v784
      %853 = vadd.xlane.f32.xlu0 %v852
      %v854 = vpop.xlane.xlu0 %853
      %v855 = vadd.f32 %v785, %v786
      %856 = vadd.xlane.f32.xlu0 %v855
      %v857 = vpop.xlane.xlu0 %856
      %v858 = vadd.f32 %v787, %v788
      %859 = vadd.xlane.f32.xlu0 %v858
      %v860 = vpop.xlane.xlu0 %859
      %v861 = vadd.f32 %v789, %v790
      %862 = vadd.xlane.f32.xlu0 %v861
      %v863 = vpop.xlane.xlu0 %862
      %v864 = vadd.f32 %v791, %v792
      %865 = vadd.xlane.f32.xlu0 %v864
      %v866 = vpop.xlane.xlu0 %865
      %v867 = vadd.f32 %v793, %v794
      %868 = vadd.xlane.f32.xlu0 %v867
      %v869 = vpop.xlane.xlu0 %868
      %v870 = vadd.f32 %v795, %v796
      %871 = vadd.xlane.f32.xlu0 %v870
      %v872 = vpop.xlane.xlu0 %871
      %v873 = vadd.f32 %v797, %v798
      %874 = vadd.xlane.f32.xlu0 %v873
      %v875 = vpop.xlane.xlu0 %874
      %v876 = vadd.f32 %v799, %v800
      %877 = vadd.xlane.f32.xlu0 %v876
      %v878 = vpop.xlane.xlu0 %877
      %v879 = vadd.f32 %v801, %v802
      %880 = vadd.xlane.f32.xlu0 %v879
      %v881 = vpop.xlane.xlu0 %880
      %v882 = vadd.f32 %v803, %v804
      %883 = vadd.xlane.f32.xlu0 %v882
      %v884 = vpop.xlane.xlu0 %883
      %v885 = vadd.f32 %v805, %v806
      %886 = vadd.xlane.f32.xlu0 %v885
      %v887 = vpop.xlane.xlu0 %886
      %v888 = vadd.f32 %v807, %v808
      %889 = vadd.xlane.f32.xlu0 %v888
      %v890 = vpop.xlane.xlu0 %889
      %v891 = vadd.f32 %v809, %v810
      %892 = vadd.xlane.f32.xlu0 %v891
      %v893 = vpop.xlane.xlu0 %892
      %v894 = vadd.f32 %v811, %v812
      %895 = vadd.xlane.f32.xlu0 %v894
      %v896 = vpop.xlane.xlu0 %895
      %v897 = vadd.f32 %v813, %v814
      %898 = vadd.xlane.f32.xlu0 %v897
      %v899 = vpop.xlane.xlu0 %898
      %v900 = vadd.f32 %v815, %v816
      %901 = vadd.xlane.f32.xlu0 %v900
      %v902 = vpop.xlane.xlu0 %901
      %v903 = vadd.f32 %v817, %v818
      %904 = vadd.xlane.f32.xlu0 %v903
      %v905 = vpop.xlane.xlu0 %904
      %v906 = vadd.f32 %v819, %v820
      %907 = vadd.xlane.f32.xlu0 %v906
      %v908 = vpop.xlane.xlu0 %907
      %v909 = vadd.f32 %v821, %v822
      %910 = vadd.xlane.f32.xlu0 %v909
      %v911 = vpop.xlane.xlu0 %910
      %v912 = vadd.f32 %v823, %v824
      %913 = vadd.xlane.f32.xlu0 %v912
      %v914 = vpop.xlane.xlu0 %913
      %v915 = vadd.f32 %v825, %v826
      %916 = vadd.xlane.f32.xlu0 %v915
      %v917 = vpop.xlane.xlu0 %916
      %v918 = vadd.f32 %v827, %v828
      %919 = vadd.xlane.f32.xlu0 %v918
      %v920 = vpop.xlane.xlu0 %919
      %v921 = vadd.f32 %v829, %v830
      %922 = vadd.xlane.f32.xlu0 %v921
      %v923 = vpop.xlane.xlu0 %922
      %v924 = vadd.f32 %v831, %v832
      %925 = vadd.xlane.f32.xlu0 %v924
      %v926 = vpop.xlane.xlu0 %925
      %v927 = vadd.f32 %v833, %v834
      %928 = vadd.xlane.f32.xlu0 %v927
      %v929 = vpop.xlane.xlu0 %928
      %v930 = vadd.f32 %v835, %v836
      %931 = vadd.xlane.f32.xlu0 %v930
      %v932 = vpop.xlane.xlu0 %931
      %v933 = vmul.f32 %v839, 0.00390625
      %v934 = vmul.f32 %v842, 0.00390625
      %v935 = vmul.f32 %v845, 0.00390625
      %v936 = vmul.f32 %v848, 0.00390625
      %v937 = vmul.f32 %v851, 0.00390625
      %v938 = vmul.f32 %v854, 0.00390625
      %v939 = vmul.f32 %v857, 0.00390625
      %v940 = vmul.f32 %v860, 0.00390625
      %v941 = vmul.f32 %v863, 0.00390625
      %v942 = vmul.f32 %v866, 0.00390625
      %v943 = vmul.f32 %v869, 0.00390625
      %v944 = vmul.f32 %v872, 0.00390625
      %v945 = vmul.f32 %v875, 0.00390625
      %v946 = vmul.f32 %v878, 0.00390625
      %v947 = vmul.f32 %v881, 0.00390625
      %v948 = vmul.f32 %v884, 0.00390625
      %v949 = vmul.f32 %v887, 0.00390625
      %v950 = vmul.f32 %v890, 0.00390625
      %v951 = vmul.f32 %v893, 0.00390625
      %v952 = vmul.f32 %v896, 0.00390625
      %v953 = vmul.f32 %v899, 0.00390625
      %v954 = vmul.f32 %v902, 0.00390625
      %v955 = vmul.f32 %v905, 0.00390625
      %v956 = vmul.f32 %v908, 0.00390625
      %v957 = vmul.f32 %v911, 0.00390625
      %v958 = vmul.f32 %v914, 0.00390625
      %v959 = vmul.f32 %v917, 0.00390625
      %v960 = vmul.f32 %v920, 0.00390625
      %v961 = vmul.f32 %v923, 0.00390625
      %v962 = vmul.f32 %v926, 0.00390625
      %v963 = vmul.f32 %v929, 0.00390625
      %v964 = vmul.f32 %v932, 0.00390625
      %v965 = vsub.f32 %v773, %v933
      %v966 = vsub.f32 %v774, %v933
      %v967 = vsub.f32 %v775, %v934
      %v968 = vsub.f32 %v776, %v934
      %v969 = vsub.f32 %v777, %v935
      %v970 = vsub.f32 %v778, %v935
      %v971 = vsub.f32 %v779, %v936
      %v972 = vsub.f32 %v780, %v936
      %v973 = vsub.f32 %v781, %v937
      %v974 = vsub.f32 %v782, %v937
      %v975 = vsub.f32 %v783, %v938
      %v976 = vsub.f32 %v784, %v938
      %v977 = vsub.f32 %v785, %v939
      %v978 = vsub.f32 %v786, %v939
      %v979 = vsub.f32 %v787, %v940
      %v980 = vsub.f32 %v788, %v940
      %v981 = vsub.f32 %v789, %v941
      %v982 = vsub.f32 %v790, %v941
      %v983 = vsub.f32 %v791, %v942
      %v984 = vsub.f32 %v792, %v942
      %v985 = vsub.f32 %v793, %v943
      %v986 = vsub.f32 %v794, %v943
      %v987 = vsub.f32 %v795, %v944
      %v988 = vsub.f32 %v796, %v944
      %v989 = vsub.f32 %v797, %v945
      %v990 = vsub.f32 %v798, %v945
      %v991 = vsub.f32 %v799, %v946
      %v992 = vsub.f32 %v800, %v946
      %v993 = vsub.f32 %v801, %v947
      %v994 = vsub.f32 %v802, %v947
      %v995 = vsub.f32 %v803, %v948
      %v996 = vsub.f32 %v804, %v948
      %v997 = vsub.f32 %v805, %v949
      %v998 = vsub.f32 %v806, %v949
      %v999 = vsub.f32 %v807, %v950
      %v1000 = vsub.f32 %v808, %v950
      %v1001 = vsub.f32 %v809, %v951
      %v1002 = vsub.f32 %v810, %v951
      %v1003 = vsub.f32 %v811, %v952
      %v1004 = vsub.f32 %v812, %v952
      %v1005 = vsub.f32 %v813, %v953
      %v1006 = vsub.f32 %v814, %v953
      %v1007 = vsub.f32 %v815, %v954
      %v1008 = vsub.f32 %v816, %v954
      %v1009 = vsub.f32 %v817, %v955
      %v1010 = vsub.f32 %v818, %v955
      %v1011 = vsub.f32 %v819, %v956
      %v1012 = vsub.f32 %v820, %v956
      %v1013 = vsub.f32 %v821, %v957
      %v1014 = vsub.f32 %v822, %v957
      %v1015 = vsub.f32 %v823, %v958
      %v1016 = vsub.f32 %v824, %v958
      %v1017 = vsub.f32 %v825, %v959
      %v1018 = vsub.f32 %v826, %v959
      %v1019 = vsub.f32 %v827, %v960
      %v1020 = vsub.f32 %v828, %v960
      %v1021 = vsub.f32 %v829, %v961
      %v1022 = vsub.f32 %v830, %v961
      %v1023 = vsub.f32 %v831, %v962
      %v1024 = vsub.f32 %v832, %v962
      %v1025 = vsub.f32 %v833, %v963
      %v1026 = vsub.f32 %v834, %v963
      %v1027 = vsub.f32 %v835, %v964
      %v1028 = vsub.f32 %v836, %v964
      %v1029 = vmul.f32 %v965, %v965
      %v1030 = vmul.f32 %v966, %v966
      %v1031 = vmul.f32 %v967, %v967
      %v1032 = vmul.f32 %v968, %v968
      %v1033 = vmul.f32 %v969, %v969
      %v1034 = vmul.f32 %v970, %v970
      %v1035 = vmul.f32 %v971, %v971
      %v1036 = vmul.f32 %v972, %v972
      %v1037 = vmul.f32 %v973, %v973
      %v1038 = vmul.f32 %v974, %v974
      %v1039 = vmul.f32 %v975, %v975
      %v1040 = vmul.f32 %v976, %v976
      %v1041 = vmul.f32 %v977, %v977
      %v1042 = vmul.f32 %v978, %v978
      %v1043 = vmul.f32 %v979, %v979
      %v1044 = vmul.f32 %v980, %v980
      %v1045 = vmul.f32 %v981, %v981
      %v1046 = vmul.f32 %v982, %v982
      %v1047 = vmul.f32 %v983, %v983
      %v1048 = vmul.f32 %v984, %v984
      %v1049 = vmul.f32 %v985, %v985
      %v1050 = vmul.f32 %v986, %v986
      %v1051 = vmul.f32 %v987, %v987
      %v1052 = vmul.f32 %v988, %v988
      %v1053 = vmul.f32 %v989, %v989
      %v1054 = vmul.f32 %v990, %v990
      %v1055 = vmul.f32 %v991, %v991
      %v1056 = vmul.f32 %v992, %v992
      %v1057 = vmul.f32 %v993, %v993
      %v1058 = vmul.f32 %v994, %v994
      %v1059 = vmul.f32 %v995, %v995
      %v1060 = vmul.f32 %v996, %v996
      %v1061 = vmul.f32 %v997, %v997
      %v1062 = vmul.f32 %v998, %v998
      %v1063 = vmul.f32 %v999, %v999
      %v1064 = vmul.f32 %v1000, %v1000
      %v1065 = vmul.f32 %v1001, %v1001
      %v1066 = vmul.f32 %v1002, %v1002
      %v1067 = vmul.f32 %v1003, %v1003
      %v1068 = vmul.f32 %v1004, %v1004
      %v1069 = vmul.f32 %v1005, %v1005
      %v1070 = vmul.f32 %v1006, %v1006
      %v1071 = vmul.f32 %v1007, %v1007
      %v1072 = vmul.f32 %v1008, %v1008
      %v1073 = vmul.f32 %v1009, %v1009
      %v1074 = vmul.f32 %v1010, %v1010
      %v1075 = vmul.f32 %v1011, %v1011
      %v1076 = vmul.f32 %v1012, %v1012
      %v1077 = vmul.f32 %v1013, %v1013
      %v1078 = vmul.f32 %v1014, %v1014
      %v1079 = vmul.f32 %v1015, %v1015
      %v1080 = vmul.f32 %v1016, %v1016
      %v1081 = vmul.f32 %v1017, %v1017
      %v1082 = vmul.f32 %v1018, %v1018
      %v1083 = vmul.f32 %v1019, %v1019
      %v1084 = vmul.f32 %v1020, %v1020
      %v1085 = vmul.f32 %v1021, %v1021
      %v1086 = vmul.f32 %v1022, %v1022
      %v1087 = vmul.f32 %v1023, %v1023
      %v1088 = vmul.f32 %v1024, %v1024
      %v1089 = vmul.f32 %v1025, %v1025
      %v1090 = vmul.f32 %v1026, %v1026
      %v1091 = vmul.f32 %v1027, %v1027
      %v1092 = vmul.f32 %v1028, %v1028
      %v1093 = vadd.f32 %v1029, %v1030
      %1094 = vadd.xlane.f32.xlu0 %v1093
      %v1095 = vpop.xlane.xlu0 %1094
      %v1096 = vadd.f32 %v1031, %v1032
      %1097 = vadd.xlane.f32.xlu0 %v1096
      %v1098 = vpop.xlane.xlu0 %1097
      %v1099 = vadd.f32 %v1033, %v1034
      %1100 = vadd.xlane.f32.xlu0 %v1099
      %v1101 = vpop.xlane.xlu0 %1100
      %v1102 = vadd.f32 %v1035, %v1036
      %1103 = vadd.xlane.f32.xlu0 %v1102
      %v1104 = vpop.xlane.xlu0 %1103
      %v1105 = vadd.f32 %v1037, %v1038
      %1106 = vadd.xlane.f32.xlu0 %v1105
      %v1107 = vpop.xlane.xlu0 %1106
      %v1108 = vadd.f32 %v1039, %v1040
      %1109 = vadd.xlane.f32.xlu0 %v1108
      %v1110 = vpop.xlane.xlu0 %1109
      %v1111 = vadd.f32 %v1041, %v1042
      %1112 = vadd.xlane.f32.xlu0 %v1111
      %v1113 = vpop.xlane.xlu0 %1112
      %v1114 = vadd.f32 %v1043, %v1044
      %1115 = vadd.xlane.f32.xlu0 %v1114
      %v1116 = vpop.xlane.xlu0 %1115
      %v1117 = vadd.f32 %v1045, %v1046
      %1118 = vadd.xlane.f32.xlu0 %v1117
      %v1119 = vpop.xlane.xlu0 %1118
      %v1120 = vadd.f32 %v1047, %v1048
      %1121 = vadd.xlane.f32.xlu0 %v1120
      %v1122 = vpop.xlane.xlu0 %1121
      %v1123 = vadd.f32 %v1049, %v1050
      %1124 = vadd.xlane.f32.xlu0 %v1123
      %v1125 = vpop.xlane.xlu0 %1124
      %v1126 = vadd.f32 %v1051, %v1052
      %1127 = vadd.xlane.f32.xlu0 %v1126
      %v1128 = vpop.xlane.xlu0 %1127
      %v1129 = vadd.f32 %v1053, %v1054
      %1130 = vadd.xlane.f32.xlu0 %v1129
      %v1131 = vpop.xlane.xlu0 %1130
      %v1132 = vadd.f32 %v1055, %v1056
      %1133 = vadd.xlane.f32.xlu0 %v1132
      %v1134 = vpop.xlane.xlu0 %1133
      %v1135 = vadd.f32 %v1057, %v1058
      %1136 = vadd.xlane.f32.xlu0 %v1135
      %v1137 = vpop.xlane.xlu0 %1136
      %v1138 = vadd.f32 %v1059, %v1060
      %1139 = vadd.xlane.f32.xlu0 %v1138
      %v1140 = vpop.xlane.xlu0 %1139
      %v1141 = vadd.f32 %v1061, %v1062
      %1142 = vadd.xlane.f32.xlu0 %v1141
      %v1143 = vpop.xlane.xlu0 %1142
      %v1144 = vadd.f32 %v1063, %v1064
      %1145 = vadd.xlane.f32.xlu0 %v1144
      %v1146 = vpop.xlane.xlu0 %1145
      %v1147 = vadd.f32 %v1065, %v1066
      %1148 = vadd.xlane.f32.xlu0 %v1147
      %v1149 = vpop.xlane.xlu0 %1148
      %v1150 = vadd.f32 %v1067, %v1068
      %1151 = vadd.xlane.f32.xlu0 %v1150
      %v1152 = vpop.xlane.xlu0 %1151
      %v1153 = vadd.f32 %v1069, %v1070
      %1154 = vadd.xlane.f32.xlu0 %v1153
      %v1155 = vpop.xlane.xlu0 %1154
      %v1156 = vadd.f32 %v1071, %v1072
      %1157 = vadd.xlane.f32.xlu0 %v1156
      %v1158 = vpop.xlane.xlu0 %1157
      %v1159 = vadd.f32 %v1073, %v1074
      %1160 = vadd.xlane.f32.xlu0 %v1159
      %v1161 = vpop.xlane.xlu0 %1160
      %v1162 = vadd.f32 %v1075, %v1076
      %1163 = vadd.xlane.f32.xlu0 %v1162
      %v1164 = vpop.xlane.xlu0 %1163
      %v1165 = vadd.f32 %v1077, %v1078
      %1166 = vadd.xlane.f32.xlu0 %v1165
      %v1167 = vpop.xlane.xlu0 %1166
      %v1168 = vadd.f32 %v1079, %v1080
      %1169 = vadd.xlane.f32.xlu0 %v1168
      %v1170 = vpop.xlane.xlu0 %1169
      %v1171 = vadd.f32 %v1081, %v1082
      %1172 = vadd.xlane.f32.xlu0 %v1171
      %v1173 = vpop.xlane.xlu0 %1172
      %v1174 = vadd.f32 %v1083, %v1084
      %1175 = vadd.xlane.f32.xlu0 %v1174
      %v1176 = vpop.xlane.xlu0 %1175
      %v1177 = vadd.f32 %v1085, %v1086
      %1178 = vadd.xlane.f32.xlu0 %v1177
      %v1179 = vpop.xlane.xlu0 %1178
      %v1180 = vadd.f32 %v1087, %v1088
      %1181 = vadd.xlane.f32.xlu0 %v1180
      %v1182 = vpop.xlane.xlu0 %1181
      %v1183 = vadd.f32 %v1089, %v1090
      %1184 = vadd.xlane.f32.xlu0 %v1183
      %v1185 = vpop.xlane.xlu0 %1184
      %v1186 = vadd.f32 %v1091, %v1092
      %1187 = vadd.xlane.f32.xlu0 %v1186
      %v1188 = vpop.xlane.xlu0 %1187
      %v1189 = vmul.f32 %v1095, 0.003921569
      %v1190 = vmul.f32 %v1098, 0.003921569
      %v1191 = vmul.f32 %v1101, 0.003921569
      %v1192 = vmul.f32 %v1104, 0.003921569
      %v1193 = vmul.f32 %v1107, 0.003921569
      %v1194 = vmul.f32 %v1110, 0.003921569
      %v1195 = vmul.f32 %v1113, 0.003921569
      %v1196 = vmul.f32 %v1116, 0.003921569
      %v1197 = vmul.f32 %v1119, 0.003921569
      %v1198 = vmul.f32 %v1122, 0.003921569
      %v1199 = vmul.f32 %v1125, 0.003921569
      %v1200 = vmul.f32 %v1128, 0.003921569
      %v1201 = vmul.f32 %v1131, 0.003921569
      %v1202 = vmul.f32 %v1134, 0.003921569
      %v1203 = vmul.f32 %v1137, 0.003921569
      %v1204 = vmul.f32 %v1140, 0.003921569
      %v1205 = vmul.f32 %v1143, 0.003921569
      %v1206 = vmul.f32 %v1146, 0.003921569
      %v1207 = vmul.f32 %v1149, 0.003921569
      %v1208 = vmul.f32 %v1152, 0.003921569
      %v1209 = vmul.f32 %v1155, 0.003921569
      %v1210 = vmul.f32 %v1158, 0.003921569
      %v1211 = vmul.f32 %v1161, 0.003921569
      %v1212 = vmul.f32 %v1164, 0.003921569
      %v1213 = vmul.f32 %v1167, 0.003921569
      %v1214 = vmul.f32 %v1170, 0.003921569
      %v1215 = vmul.f32 %v1173, 0.003921569
      %v1216 = vmul.f32 %v1176, 0.003921569
      %v1217 = vmul.f32 %v1179, 0.003921569
      %v1218 = vmul.f32 %v1182, 0.003921569
      %v1219 = vmul.f32 %v1185, 0.003921569
      %v1220 = vmul.f32 %v1188, 0.003921569
      %v1221 = vrsqrt.pop %v1189
      %v1222 = vmul.f32 %v1189, %v1221
      %vm1223 = vcmp.eq.f32.partialorder %v1189, inf
      %v1224 = vsel %vm1223, %v1189, %v1222
      %vm1225 = vcmp.eq.f32.partialorder %v1189, 0.0
      %v1226 = vand.u32 %v1189, 2147483648
      %v1227 = vsel %vm1225, %v1226, %v1224
      %v1228 = vrsqrt.pop %v1190
      %v1229 = vmul.f32 %v1190, %v1228
      %vm1230 = vcmp.eq.f32.partialorder %v1190, inf
      %v1231 = vsel %vm1230, %v1190, %v1229
      %vm1232 = vcmp.eq.f32.partialorder %v1190, 0.0
      %v1233 = vand.u32 %v1190, 2147483648
      %v1234 = vsel %vm1232, %v1233, %v1231
      %v1235 = vrsqrt.pop %v1191
      %v1236 = vmul.f32 %v1191, %v1235
      %vm1237 = vcmp.eq.f32.partialorder %v1191, inf
      %v1238 = vsel %vm1237, %v1191, %v1236
      %vm1239 = vcmp.eq.f32.partialorder %v1191, 0.0
      %v1240 = vand.u32 %v1191, 2147483648
      %v1241 = vsel %vm1239, %v1240, %v1238
      %v1242 = vrsqrt.pop %v1192
      %v1243 = vmul.f32 %v1192, %v1242
      %vm1244 = vcmp.eq.f32.partialorder %v1192, inf
      %v1245 = vsel %vm1244, %v1192, %v1243
      %vm1246 = vcmp.eq.f32.partialorder %v1192, 0.0
      %v1247 = vand.u32 %v1192, 2147483648
      %v1248 = vsel %vm1246, %v1247, %v1245
      %v1249 = vrsqrt.pop %v1193
      %v1250 = vmul.f32 %v1193, %v1249
      %vm1251 = vcmp.eq.f32.partialorder %v1193, inf
      %v1252 = vsel %vm1251, %v1193, %v1250
      %vm1253 = vcmp.eq.f32.partialorder %v1193, 0.0
      %v1254 = vand.u32 %v1193, 2147483648
      %v1255 = vsel %vm1253, %v1254, %v1252
      %v1256 = vrsqrt.pop %v1194
      %v1257 = vmul.f32 %v1194, %v1256
      %vm1258 = vcmp.eq.f32.partialorder %v1194, inf
      %v1259 = vsel %vm1258, %v1194, %v1257
      %vm1260 = vcmp.eq.f32.partialorder %v1194, 0.0
      %v1261 = vand.u32 %v1194, 2147483648
      %v1262 = vsel %vm1260, %v1261, %v1259
      %v1263 = vrsqrt.pop %v1195
      %v1264 = vmul.f32 %v1195, %v1263
      %vm1265 = vcmp.eq.f32.partialorder %v1195, inf
      %v1266 = vsel %vm1265, %v1195, %v1264
      %vm1267 = vcmp.eq.f32.partialorder %v1195, 0.0
      %v1268 = vand.u32 %v1195, 2147483648
      %v1269 = vsel %vm1267, %v1268, %v1266
      %v1270 = vrsqrt.pop %v1196
      %v1271 = vmul.f32 %v1196, %v1270
      %vm1272 = vcmp.eq.f32.partialorder %v1196, inf
      %v1273 = vsel %vm1272, %v1196, %v1271
      %vm1274 = vcmp.eq.f32.partialorder %v1196, 0.0
      %v1275 = vand.u32 %v1196, 2147483648
      %v1276 = vsel %vm1274, %v1275, %v1273
      %v1277 = vrsqrt.pop %v1197
      %v1278 = vmul.f32 %v1197, %v1277
      %vm1279 = vcmp.eq.f32.partialorder %v1197, inf
      %v1280 = vsel %vm1279, %v1197, %v1278
      %vm1281 = vcmp.eq.f32.partialorder %v1197, 0.0
      %v1282 = vand.u32 %v1197, 2147483648
      %v1283 = vsel %vm1281, %v1282, %v1280
      %v1284 = vrsqrt.pop %v1198
      %v1285 = vmul.f32 %v1198, %v1284
      %vm1286 = vcmp.eq.f32.partialorder %v1198, inf
      %v1287 = vsel %vm1286, %v1198, %v1285
      %vm1288 = vcmp.eq.f32.partialorder %v1198, 0.0
      %v1289 = vand.u32 %v1198, 2147483648
      %v1290 = vsel %vm1288, %v1289, %v1287
      %v1291 = vrsqrt.pop %v1199
      %v1292 = vmul.f32 %v1199, %v1291
      %vm1293 = vcmp.eq.f32.partialorder %v1199, inf
      %v1294 = vsel %vm1293, %v1199, %v1292
      %vm1295 = vcmp.eq.f32.partialorder %v1199, 0.0
      %v1296 = vand.u32 %v1199, 2147483648
      %v1297 = vsel %vm1295, %v1296, %v1294
      %v1298 = vrsqrt.pop %v1200
      %v1299 = vmul.f32 %v1200, %v1298
      %vm1300 = vcmp.eq.f32.partialorder %v1200, inf
      %v1301 = vsel %vm1300, %v1200, %v1299
      %vm1302 = vcmp.eq.f32.partialorder %v1200, 0.0
      %v1303 = vand.u32 %v1200, 2147483648
      %v1304 = vsel %vm1302, %v1303, %v1301
      %v1305 = vrsqrt.pop %v1201
      %v1306 = vmul.f32 %v1201, %v1305
      %vm1307 = vcmp.eq.f32.partialorder %v1201, inf
      %v1308 = vsel %vm1307, %v1201, %v1306
      %vm1309 = vcmp.eq.f32.partialorder %v1201, 0.0
      %v1310 = vand.u32 %v1201, 2147483648
      %v1311 = vsel %vm1309, %v1310, %v1308
      %v1312 = vrsqrt.pop %v1202
      %v1313 = vmul.f32 %v1202, %v1312
      %vm1314 = vcmp.eq.f32.partialorder %v1202, inf
      %v1315 = vsel %vm1314, %v1202, %v1313
      %vm1316 = vcmp.eq.f32.partialorder %v1202, 0.0
      %v1317 = vand.u32 %v1202, 2147483648
      %v1318 = vsel %vm1316, %v1317, %v1315
      %v1319 = vrsqrt.pop %v1203
      %v1320 = vmul.f32 %v1203, %v1319
      %vm1321 = vcmp.eq.f32.partialorder %v1203, inf
      %v1322 = vsel %vm1321, %v1203, %v1320
      %vm1323 = vcmp.eq.f32.partialorder %v1203, 0.0
      %v1324 = vand.u32 %v1203, 2147483648
      %v1325 = vsel %vm1323, %v1324, %v1322
      %v1326 = vrsqrt.pop %v1204
      %v1327 = vmul.f32 %v1204, %v1326
      %vm1328 = vcmp.eq.f32.partialorder %v1204, inf
      %v1329 = vsel %vm1328, %v1204, %v1327
      %vm1330 = vcmp.eq.f32.partialorder %v1204, 0.0
      %v1331 = vand.u32 %v1204, 2147483648
      %v1332 = vsel %vm1330, %v1331, %v1329
      %v1333 = vrsqrt.pop %v1205
      %v1334 = vmul.f32 %v1205, %v1333
      %vm1335 = vcmp.eq.f32.partialorder %v1205, inf
      %v1336 = vsel %vm1335, %v1205, %v1334
      %vm1337 = vcmp.eq.f32.partialorder %v1205, 0.0
      %v1338 = vand.u32 %v1205, 2147483648
      %v1339 = vsel %vm1337, %v1338, %v1336
      %v1340 = vrsqrt.pop %v1206
      %v1341 = vmul.f32 %v1206, %v1340
      %vm1342 = vcmp.eq.f32.partialorder %v1206, inf
      %v1343 = vsel %vm1342, %v1206, %v1341
      %vm1344 = vcmp.eq.f32.partialorder %v1206, 0.0
      %v1345 = vand.u32 %v1206, 2147483648
      %v1346 = vsel %vm1344, %v1345, %v1343
      %v1347 = vrsqrt.pop %v1207
      %v1348 = vmul.f32 %v1207, %v1347
      %vm1349 = vcmp.eq.f32.partialorder %v1207, inf
      %v1350 = vsel %vm1349, %v1207, %v1348
      %vm1351 = vcmp.eq.f32.partialorder %v1207, 0.0
      %v1352 = vand.u32 %v1207, 2147483648
      %v1353 = vsel %vm1351, %v1352, %v1350
      %v1354 = vrsqrt.pop %v1208
      %v1355 = vmul.f32 %v1208, %v1354
      %vm1356 = vcmp.eq.f32.partialorder %v1208, inf
      %v1357 = vsel %vm1356, %v1208, %v1355
      %vm1358 = vcmp.eq.f32.partialorder %v1208, 0.0
      %v1359 = vand.u32 %v1208, 2147483648
      %v1360 = vsel %vm1358, %v1359, %v1357
      %v1361 = vrsqrt.pop %v1209
      %v1362 = vmul.f32 %v1209, %v1361
      %vm1363 = vcmp.eq.f32.partialorder %v1209, inf
      %v1364 = vsel %vm1363, %v1209, %v1362
      %vm1365 = vcmp.eq.f32.partialorder %v1209, 0.0
      %v1366 = vand.u32 %v1209, 2147483648
      %v1367 = vsel %vm1365, %v1366, %v1364
      %v1368 = vrsqrt.pop %v1210
      %v1369 = vmul.f32 %v1210, %v1368
      %vm1370 = vcmp.eq.f32.partialorder %v1210, inf
      %v1371 = vsel %vm1370, %v1210, %v1369
      %vm1372 = vcmp.eq.f32.partialorder %v1210, 0.0
      %v1373 = vand.u32 %v1210, 2147483648
      %v1374 = vsel %vm1372, %v1373, %v1371
      %v1375 = vrsqrt.pop %v1211
      %v1376 = vmul.f32 %v1211, %v1375
      %vm1377 = vcmp.eq.f32.partialorder %v1211, inf
      %v1378 = vsel %vm1377, %v1211, %v1376
      %vm1379 = vcmp.eq.f32.partialorder %v1211, 0.0
      %v1380 = vand.u32 %v1211, 2147483648
      %v1381 = vsel %vm1379, %v1380, %v1378
      %v1382 = vrsqrt.pop %v1212
      %v1383 = vmul.f32 %v1212, %v1382
      %vm1384 = vcmp.eq.f32.partialorder %v1212, inf
      %v1385 = vsel %vm1384, %v1212, %v1383
      %vm1386 = vcmp.eq.f32.partialorder %v1212, 0.0
      %v1387 = vand.u32 %v1212, 2147483648
      %v1388 = vsel %vm1386, %v1387, %v1385
      %v1389 = vrsqrt.pop %v1213
      %v1390 = vmul.f32 %v1213, %v1389
      %vm1391 = vcmp.eq.f32.partialorder %v1213, inf
      %v1392 = vsel %vm1391, %v1213, %v1390
      %vm1393 = vcmp.eq.f32.partialorder %v1213, 0.0
      %v1394 = vand.u32 %v1213, 2147483648
      %v1395 = vsel %vm1393, %v1394, %v1392
      %v1396 = vrsqrt.pop %v1214
      %v1397 = vmul.f32 %v1214, %v1396
      %vm1398 = vcmp.eq.f32.partialorder %v1214, inf
      %v1399 = vsel %vm1398, %v1214, %v1397
      %vm1400 = vcmp.eq.f32.partialorder %v1214, 0.0
      %v1401 = vand.u32 %v1214, 2147483648
      %v1402 = vsel %vm1400, %v1401, %v1399
      %v1403 = vrsqrt.pop %v1215
      %v1404 = vmul.f32 %v1215, %v1403
      %vm1405 = vcmp.eq.f32.partialorder %v1215, inf
      %v1406 = vsel %vm1405, %v1215, %v1404
      %vm1407 = vcmp.eq.f32.partialorder %v1215, 0.0
      %v1408 = vand.u32 %v1215, 2147483648
      %v1409 = vsel %vm1407, %v1408, %v1406
      %v1410 = vrsqrt.pop %v1216
      %v1411 = vmul.f32 %v1216, %v1410
      %vm1412 = vcmp.eq.f32.partialorder %v1216, inf
      %v1413 = vsel %vm1412, %v1216, %v1411
      %vm1414 = vcmp.eq.f32.partialorder %v1216, 0.0
      %v1415 = vand.u32 %v1216, 2147483648
      %v1416 = vsel %vm1414, %v1415, %v1413
      %v1417 = vrsqrt.pop %v1217
      %v1418 = vmul.f32 %v1217, %v1417
      %vm1419 = vcmp.eq.f32.partialorder %v1217, inf
      %v1420 = vsel %vm1419, %v1217, %v1418
      %vm1421 = vcmp.eq.f32.partialorder %v1217, 0.0
      %v1422 = vand.u32 %v1217, 2147483648
      %v1423 = vsel %vm1421, %v1422, %v1420
      %v1424 = vrsqrt.pop %v1218
      %v1425 = vmul.f32 %v1218, %v1424
      %vm1426 = vcmp.eq.f32.partialorder %v1218, inf
      %v1427 = vsel %vm1426, %v1218, %v1425
      %vm1428 = vcmp.eq.f32.partialorder %v1218, 0.0
      %v1429 = vand.u32 %v1218, 2147483648
      %v1430 = vsel %vm1428, %v1429, %v1427
      %v1431 = vrsqrt.pop %v1219
      %v1432 = vmul.f32 %v1219, %v1431
      %vm1433 = vcmp.eq.f32.partialorder %v1219, inf
      %v1434 = vsel %vm1433, %v1219, %v1432
      %vm1435 = vcmp.eq.f32.partialorder %v1219, 0.0
      %v1436 = vand.u32 %v1219, 2147483648
      %v1437 = vsel %vm1435, %v1436, %v1434
      %v1438 = vrsqrt.pop %v1220
      %v1439 = vmul.f32 %v1220, %v1438
      %vm1440 = vcmp.eq.f32.partialorder %v1220, inf
      %v1441 = vsel %vm1440, %v1220, %v1439
      %vm1442 = vcmp.eq.f32.partialorder %v1220, 0.0
      %v1443 = vand.u32 %v1220, 2147483648
      %v1444 = vsel %vm1442, %v1443, %v1441
      %v1445 = vadd.f32 %v1227, 1e-06
      %v1446 = vadd.f32 %v1234, 1e-06
      %v1447 = vadd.f32 %v1241, 1e-06
      %v1448 = vadd.f32 %v1248, 1e-06
      %v1449 = vadd.f32 %v1255, 1e-06
      %v1450 = vadd.f32 %v1262, 1e-06
      %v1451 = vadd.f32 %v1269, 1e-06
      %v1452 = vadd.f32 %v1276, 1e-06
      %v1453 = vadd.f32 %v1283, 1e-06
      %v1454 = vadd.f32 %v1290, 1e-06
      %v1455 = vadd.f32 %v1297, 1e-06
      %v1456 = vadd.f32 %v1304, 1e-06
      %v1457 = vadd.f32 %v1311, 1e-06
      %v1458 = vadd.f32 %v1318, 1e-06
      %v1459 = vadd.f32 %v1325, 1e-06
      %v1460 = vadd.f32 %v1332, 1e-06
      %v1461 = vadd.f32 %v1339, 1e-06
      %v1462 = vadd.f32 %v1346, 1e-06
      %v1463 = vadd.f32 %v1353, 1e-06
      %v1464 = vadd.f32 %v1360, 1e-06
      %v1465 = vadd.f32 %v1367, 1e-06
      %v1466 = vadd.f32 %v1374, 1e-06
      %v1467 = vadd.f32 %v1381, 1e-06
      %v1468 = vadd.f32 %v1388, 1e-06
      %v1469 = vadd.f32 %v1395, 1e-06
      %v1470 = vadd.f32 %v1402, 1e-06
      %v1471 = vadd.f32 %v1409, 1e-06
      %v1472 = vadd.f32 %v1416, 1e-06
      %v1473 = vadd.f32 %v1423, 1e-06
      %v1474 = vadd.f32 %v1430, 1e-06
      %v1475 = vadd.f32 %v1437, 1e-06
      %v1476 = vadd.f32 %v1444, 1e-06
      %v1477 = vrcp.pop %v1445
      %v1478 = vrcp.pop %v1446
      %v1479 = vrcp.pop %v1447
      %v1480 = vrcp.pop %v1448
      %v1481 = vrcp.pop %v1449
      %v1482 = vrcp.pop %v1450
      %v1483 = vrcp.pop %v1451
      %v1484 = vrcp.pop %v1452
      %v1485 = vrcp.pop %v1453
      %v1486 = vrcp.pop %v1454
      %v1487 = vrcp.pop %v1455
      %v1488 = vrcp.pop %v1456
      %v1489 = vrcp.pop %v1457
      %v1490 = vrcp.pop %v1458
      %v1491 = vrcp.pop %v1459
      %v1492 = vrcp.pop %v1460
      %v1493 = vrcp.pop %v1461
      %v1494 = vrcp.pop %v1462
      %v1495 = vrcp.pop %v1463
      %v1496 = vrcp.pop %v1464
      %v1497 = vrcp.pop %v1465
      %v1498 = vrcp.pop %v1466
      %v1499 = vrcp.pop %v1467
      %v1500 = vrcp.pop %v1468
      %v1501 = vrcp.pop %v1469
      %v1502 = vrcp.pop %v1470
      %v1503 = vrcp.pop %v1471
      %v1504 = vrcp.pop %v1472
      %v1505 = vrcp.pop %v1473
      %v1506 = vrcp.pop %v1474
      %v1507 = vrcp.pop %v1475
      %v1508 = vrcp.pop %v1476
      %v1509 = vmul.f32 %v965, %v1477
      %v1510 = vmul.f32 %v966, %v1477
      %v1511 = vmul.f32 %v967, %v1478
      %v1512 = vmul.f32 %v968, %v1478
      %v1513 = vmul.f32 %v969, %v1479
      %v1514 = vmul.f32 %v970, %v1479
      %v1515 = vmul.f32 %v971, %v1480
      %v1516 = vmul.f32 %v972, %v1480
      %v1517 = vmul.f32 %v973, %v1481
      %v1518 = vmul.f32 %v974, %v1481
      %v1519 = vmul.f32 %v975, %v1482
      %v1520 = vmul.f32 %v976, %v1482
      %v1521 = vmul.f32 %v977, %v1483
      %v1522 = vmul.f32 %v978, %v1483
      %v1523 = vmul.f32 %v979, %v1484
      %v1524 = vmul.f32 %v980, %v1484
      %v1525 = vmul.f32 %v981, %v1485
      %v1526 = vmul.f32 %v982, %v1485
      %v1527 = vmul.f32 %v983, %v1486
      %v1528 = vmul.f32 %v984, %v1486
      %v1529 = vmul.f32 %v985, %v1487
      %v1530 = vmul.f32 %v986, %v1487
      %v1531 = vmul.f32 %v987, %v1488
      %v1532 = vmul.f32 %v988, %v1488
      %v1533 = vmul.f32 %v989, %v1489
      %v1534 = vmul.f32 %v990, %v1489
      %v1535 = vmul.f32 %v991, %v1490
      %v1536 = vmul.f32 %v992, %v1490
      %v1537 = vmul.f32 %v993, %v1491
      %v1538 = vmul.f32 %v994, %v1491
      %v1539 = vmul.f32 %v995, %v1492
      %v1540 = vmul.f32 %v996, %v1492
      %v1541 = vmul.f32 %v997, %v1493
      %v1542 = vmul.f32 %v998, %v1493
      %v1543 = vmul.f32 %v999, %v1494
      %v1544 = vmul.f32 %v1000, %v1494
      %v1545 = vmul.f32 %v1001, %v1495
      %v1546 = vmul.f32 %v1002, %v1495
      %v1547 = vmul.f32 %v1003, %v1496
      %v1548 = vmul.f32 %v1004, %v1496
      %v1549 = vmul.f32 %v1005, %v1497
      %v1550 = vmul.f32 %v1006, %v1497
      %v1551 = vmul.f32 %v1007, %v1498
      %v1552 = vmul.f32 %v1008, %v1498
      %v1553 = vmul.f32 %v1009, %v1499
      %v1554 = vmul.f32 %v1010, %v1499
      %v1555 = vmul.f32 %v1011, %v1500
      %v1556 = vmul.f32 %v1012, %v1500
      %v1557 = vmul.f32 %v1013, %v1501
      %v1558 = vmul.f32 %v1014, %v1501
      %v1559 = vmul.f32 %v1015, %v1502
      %v1560 = vmul.f32 %v1016, %v1502
      %v1561 = vmul.f32 %v1017, %v1503
      %v1562 = vmul.f32 %v1018, %v1503
      %v1563 = vmul.f32 %v1019, %v1504
      %v1564 = vmul.f32 %v1020, %v1504
      %v1565 = vmul.f32 %v1021, %v1505
      %v1566 = vmul.f32 %v1022, %v1505
      %v1567 = vmul.f32 %v1023, %v1506
      %v1568 = vmul.f32 %v1024, %v1506
      %v1569 = vmul.f32 %v1025, %v1507
      %v1570 = vmul.f32 %v1026, %v1507
      %v1571 = vmul.f32 %v1027, %v1508
      %v1572 = vmul.f32 %v1028, %v1508
      %v1573 = vtanh.pop %v1509
      %v1574 = vtanh.pop %v1510
      %v1575 = vtanh.pop %v1511
      %v1576 = vtanh.pop %v1512
      %v1577 = vtanh.pop %v1513
      %v1578 = vtanh.pop %v1514
      %v1579 = vtanh.pop %v1515
      %v1580 = vtanh.pop %v1516
      %v1581 = vtanh.pop %v1517
      %v1582 = vtanh.pop %v1518
      %v1583 = vtanh.pop %v1519
      %v1584 = vtanh.pop %v1520
      %v1585 = vtanh.pop %v1521
      %v1586 = vtanh.pop %v1522
      %v1587 = vtanh.pop %v1523
      %v1588 = vtanh.pop %v1524
      %v1589 = vtanh.pop %v1525
      %v1590 = vtanh.pop %v1526
      %v1591 = vtanh.pop %v1527
      %v1592 = vtanh.pop %v1528
      %v1593 = vtanh.pop %v1529
      %v1594 = vtanh.pop %v1530
      %v1595 = vtanh.pop %v1531
      %v1596 = vtanh.pop %v1532
      %v1597 = vtanh.pop %v1533
      %v1598 = vtanh.pop %v1534
      %v1599 = vtanh.pop %v1535
      %v1600 = vtanh.pop %v1536
      %v1601 = vtanh.pop %v1537
      %v1602 = vtanh.pop %v1538
      %v1603 = vtanh.pop %v1539
      %v1604 = vtanh.pop %v1540
      %v1605 = vtanh.pop %v1541
      %v1606 = vtanh.pop %v1542
      %v1607 = vtanh.pop %v1543
      %v1608 = vtanh.pop %v1544
      %v1609 = vtanh.pop %v1545
      %v1610 = vtanh.pop %v1546
      %v1611 = vtanh.pop %v1547
      %v1612 = vtanh.pop %v1548
      %v1613 = vtanh.pop %v1549
      %v1614 = vtanh.pop %v1550
      %v1615 = vtanh.pop %v1551
      %v1616 = vtanh.pop %v1552
      %v1617 = vtanh.pop %v1553
      %v1618 = vtanh.pop %v1554
      %v1619 = vtanh.pop %v1555
      %v1620 = vtanh.pop %v1556
      %v1621 = vtanh.pop %v1557
      %v1622 = vtanh.pop %v1558
      %v1623 = vtanh.pop %v1559
      %v1624 = vtanh.pop %v1560
      %v1625 = vtanh.pop %v1561
      %v1626 = vtanh.pop %v1562
      %v1627 = vtanh.pop %v1563
      %v1628 = vtanh.pop %v1564
      %v1629 = vtanh.pop %v1565
      %v1630 = vtanh.pop %v1566
      %v1631 = vtanh.pop %v1567
      %v1632 = vtanh.pop %v1568
      %v1633 = vtanh.pop %v1569
      %v1634 = vtanh.pop %v1570
      %v1635 = vtanh.pop %v1571
      %v1636 = vtanh.pop %v1572
      %v1637 = vmul.f32 %v1573, -0.1
      %v1638 = vmul.f32 %v1574, -0.1
      %v1639 = vmul.f32 %v1575, -0.1
      %v1640 = vmul.f32 %v1576, -0.1
      %v1641 = vmul.f32 %v1577, -0.1
      %v1642 = vmul.f32 %v1578, -0.1
      %v1643 = vmul.f32 %v1579, -0.1
      %v1644 = vmul.f32 %v1580, -0.1
      %v1645 = vmul.f32 %v1581, -0.1
      %v1646 = vmul.f32 %v1582, -0.1
      %v1647 = vmul.f32 %v1583, -0.1
      %v1648 = vmul.f32 %v1584, -0.1
      %v1649 = vmul.f32 %v1585, -0.1
      %v1650 = vmul.f32 %v1586, -0.1
      %v1651 = vmul.f32 %v1587, -0.1
      %v1652 = vmul.f32 %v1588, -0.1
      %v1653 = vmul.f32 %v1589, -0.1
      %v1654 = vmul.f32 %v1590, -0.1
      %v1655 = vmul.f32 %v1591, -0.1
      %v1656 = vmul.f32 %v1592, -0.1
      %v1657 = vmul.f32 %v1593, -0.1
      %v1658 = vmul.f32 %v1594, -0.1
      %v1659 = vmul.f32 %v1595, -0.1
      %v1660 = vmul.f32 %v1596, -0.1
      %v1661 = vmul.f32 %v1597, -0.1
      %v1662 = vmul.f32 %v1598, -0.1
      %v1663 = vmul.f32 %v1599, -0.1
      %v1664 = vmul.f32 %v1600, -0.1
      %v1665 = vmul.f32 %v1601, -0.1
      %v1666 = vmul.f32 %v1602, -0.1
      %v1667 = vmul.f32 %v1603, -0.1
      %v1668 = vmul.f32 %v1604, -0.1
      %v1669 = vmul.f32 %v1605, -0.1
      %v1670 = vmul.f32 %v1606, -0.1
      %v1671 = vmul.f32 %v1607, -0.1
      %v1672 = vmul.f32 %v1608, -0.1
      %v1673 = vmul.f32 %v1609, -0.1
      %v1674 = vmul.f32 %v1610, -0.1
      %v1675 = vmul.f32 %v1611, -0.1
      %v1676 = vmul.f32 %v1612, -0.1
      %v1677 = vmul.f32 %v1613, -0.1
      %v1678 = vmul.f32 %v1614, -0.1
      %v1679 = vmul.f32 %v1615, -0.1
      %v1680 = vmul.f32 %v1616, -0.1
      %v1681 = vmul.f32 %v1617, -0.1
      %v1682 = vmul.f32 %v1618, -0.1
      %v1683 = vmul.f32 %v1619, -0.1
      %v1684 = vmul.f32 %v1620, -0.1
      %v1685 = vmul.f32 %v1621, -0.1
      %v1686 = vmul.f32 %v1622, -0.1
      %v1687 = vmul.f32 %v1623, -0.1
      %v1688 = vmul.f32 %v1624, -0.1
      %v1689 = vmul.f32 %v1625, -0.1
      %v1690 = vmul.f32 %v1626, -0.1
      %v1691 = vmul.f32 %v1627, -0.1
      %v1692 = vmul.f32 %v1628, -0.1
      %v1693 = vmul.f32 %v1629, -0.1
      %v1694 = vmul.f32 %v1630, -0.1
      %v1695 = vmul.f32 %v1631, -0.1
      %v1696 = vmul.f32 %v1632, -0.1
      %v1697 = vmul.f32 %v1633, -0.1
      %v1698 = vmul.f32 %v1634, -0.1
      %v1699 = vmul.f32 %v1635, -0.1
      %v1700 = vmul.f32 %v1636, -0.1
      %v1701 = vmul.f32 %v1637, 1.442695
      %v1702 = vpow.pop %v1701
      %v1703 = vmul.f32 %v1638, 1.442695
      %v1704 = vpow.pop %v1703
      %v1705 = vmul.f32 %v1639, 1.442695
      %v1706 = vpow.pop %v1705
      %v1707 = vmul.f32 %v1640, 1.442695
      %v1708 = vpow.pop %v1707
      %v1709 = vmul.f32 %v1641, 1.442695
      %v1710 = vpow.pop %v1709
      %v1711 = vmul.f32 %v1642, 1.442695
      %v1712 = vpow.pop %v1711
      %v1713 = vmul.f32 %v1643, 1.442695
      %v1714 = vpow.pop %v1713
      %v1715 = vmul.f32 %v1644, 1.442695
      %v1716 = vpow.pop %v1715
      %v1717 = vmul.f32 %v1645, 1.442695
      %v1718 = vpow.pop %v1717
      %v1719 = vmul.f32 %v1646, 1.442695
      %v1720 = vpow.pop %v1719
      %v1721 = vmul.f32 %v1647, 1.442695
      %v1722 = vpow.pop %v1721
      %v1723 = vmul.f32 %v1648, 1.442695
      %v1724 = vpow.pop %v1723
      %v1725 = vmul.f32 %v1649, 1.442695
      %v1726 = vpow.pop %v1725
      %v1727 = vmul.f32 %v1650, 1.442695
      %v1728 = vpow.pop %v1727
      %v1729 = vmul.f32 %v1651, 1.442695
      %v1730 = vpow.pop %v1729
      %v1731 = vmul.f32 %v1652, 1.442695
      %v1732 = vpow.pop %v1731
      %v1733 = vmul.f32 %v1653, 1.442695
      %v1734 = vpow.pop %v1733
      %v1735 = vmul.f32 %v1654, 1.442695
      %v1736 = vpow.pop %v1735
      %v1737 = vmul.f32 %v1655, 1.442695
      %v1738 = vpow.pop %v1737
      %v1739 = vmul.f32 %v1656, 1.442695
      %v1740 = vpow.pop %v1739
      %v1741 = vmul.f32 %v1657, 1.442695
      %v1742 = vpow.pop %v1741
      %v1743 = vmul.f32 %v1658, 1.442695
      %v1744 = vpow.pop %v1743
      %v1745 = vmul.f32 %v1659, 1.442695
      %v1746 = vpow.pop %v1745
      %v1747 = vmul.f32 %v1660, 1.442695
      %v1748 = vpow.pop %v1747
      %v1749 = vmul.f32 %v1661, 1.442695
      %v1750 = vpow.pop %v1749
      %v1751 = vmul.f32 %v1662, 1.442695
      %v1752 = vpow.pop %v1751
      %v1753 = vmul.f32 %v1663, 1.442695
      %v1754 = vpow.pop %v1753
      %v1755 = vmul.f32 %v1664, 1.442695
      %v1756 = vpow.pop %v1755
      %v1757 = vmul.f32 %v1665, 1.442695
      %v1758 = vpow.pop %v1757
      %v1759 = vmul.f32 %v1666, 1.442695
      %v1760 = vpow.pop %v1759
      %v1761 = vmul.f32 %v1667, 1.442695
      %v1762 = vpow.pop %v1761
      %v1763 = vmul.f32 %v1668, 1.442695
      %v1764 = vpow.pop %v1763
      %v1765 = vmul.f32 %v1669, 1.442695
      %v1766 = vpow.pop %v1765
      %v1767 = vmul.f32 %v1670, 1.442695
      %v1768 = vpow.pop %v1767
      %v1769 = vmul.f32 %v1671, 1.442695
      %v1770 = vpow.pop %v1769
      %v1771 = vmul.f32 %v1672, 1.442695
      %v1772 = vpow.pop %v1771
      %v1773 = vmul.f32 %v1673, 1.442695
      %v1774 = vpow.pop %v1773
      %v1775 = vmul.f32 %v1674, 1.442695
      %v1776 = vpow.pop %v1775
      %v1777 = vmul.f32 %v1675, 1.442695
      %v1778 = vpow.pop %v1777
      %v1779 = vmul.f32 %v1676, 1.442695
      %v1780 = vpow.pop %v1779
      %v1781 = vmul.f32 %v1677, 1.442695
      %v1782 = vpow.pop %v1781
      %v1783 = vmul.f32 %v1678, 1.442695
      %v1784 = vpow.pop %v1783
      %v1785 = vmul.f32 %v1679, 1.442695
      %v1786 = vpow.pop %v1785
      %v1787 = vmul.f32 %v1680, 1.442695
      %v1788 = vpow.pop %v1787
      %v1789 = vmul.f32 %v1681, 1.442695
      %v1790 = vpow.pop %v1789
      %v1791 = vmul.f32 %v1682, 1.442695
      %v1792 = vpow.pop %v1791
      %v1793 = vmul.f32 %v1683, 1.442695
      %v1794 = vpow.pop %v1793
      %v1795 = vmul.f32 %v1684, 1.442695
      %v1796 = vpow.pop %v1795
      %v1797 = vmul.f32 %v1685, 1.442695
      %v1798 = vpow.pop %v1797
      %v1799 = vmul.f32 %v1686, 1.442695
      %v1800 = vpow.pop %v1799
      %v1801 = vmul.f32 %v1687, 1.442695
      %v1802 = vpow.pop %v1801
      %v1803 = vmul.f32 %v1688, 1.442695
      %v1804 = vpow.pop %v1803
      %v1805 = vmul.f32 %v1689, 1.442695
      %v1806 = vpow.pop %v1805
      %v1807 = vmul.f32 %v1690, 1.442695
      %v1808 = vpow.pop %v1807
      %v1809 = vmul.f32 %v1691, 1.442695
      %v1810 = vpow.pop %v1809
      %v1811 = vmul.f32 %v1692, 1.442695
      %v1812 = vpow.pop %v1811
      %v1813 = vmul.f32 %v1693, 1.442695
      %v1814 = vpow.pop %v1813
      %v1815 = vmul.f32 %v1694, 1.442695
      %v1816 = vpow.pop %v1815
      %v1817 = vmul.f32 %v1695, 1.442695
      %v1818 = vpow.pop %v1817
      %v1819 = vmul.f32 %v1696, 1.442695
      %v1820 = vpow.pop %v1819
      %v1821 = vmul.f32 %v1697, 1.442695
      %v1822 = vpow.pop %v1821
      %v1823 = vmul.f32 %v1698, 1.442695
      %v1824 = vpow.pop %v1823
      %v1825 = vmul.f32 %v1699, 1.442695
      %v1826 = vpow.pop %v1825
      %v1827 = vmul.f32 %v1700, 1.442695
      %v1828 = vpow.pop %v1827
      %v1829 = vadd.f32 %v1702, %v1704
      %1830 = vadd.xlane.f32.xlu0 %v1829
      %v1831 = vpop.xlane.xlu0 %1830
      %v1832 = vadd.f32 %v1706, %v1708
      %1833 = vadd.xlane.f32.xlu0 %v1832
      %v1834 = vpop.xlane.xlu0 %1833
      %v1835 = vadd.f32 %v1710, %v1712
      %1836 = vadd.xlane.f32.xlu0 %v1835
      %v1837 = vpop.xlane.xlu0 %1836
      %v1838 = vadd.f32 %v1714, %v1716
      %1839 = vadd.xlane.f32.xlu0 %v1838
      %v1840 = vpop.xlane.xlu0 %1839
      %v1841 = vadd.f32 %v1718, %v1720
      %1842 = vadd.xlane.f32.xlu0 %v1841
      %v1843 = vpop.xlane.xlu0 %1842
      %v1844 = vadd.f32 %v1722, %v1724
      %1845 = vadd.xlane.f32.xlu0 %v1844
      %v1846 = vpop.xlane.xlu0 %1845
      %v1847 = vadd.f32 %v1726, %v1728
      %1848 = vadd.xlane.f32.xlu0 %v1847
      %v1849 = vpop.xlane.xlu0 %1848
      %v1850 = vadd.f32 %v1730, %v1732
      %1851 = vadd.xlane.f32.xlu0 %v1850
      %v1852 = vpop.xlane.xlu0 %1851
      %v1853 = vadd.f32 %v1734, %v1736
      %1854 = vadd.xlane.f32.xlu0 %v1853
      %v1855 = vpop.xlane.xlu0 %1854
      %v1856 = vadd.f32 %v1738, %v1740
      %1857 = vadd.xlane.f32.xlu0 %v1856
      %v1858 = vpop.xlane.xlu0 %1857
      %v1859 = vadd.f32 %v1742, %v1744
      %1860 = vadd.xlane.f32.xlu0 %v1859
      %v1861 = vpop.xlane.xlu0 %1860
      %v1862 = vadd.f32 %v1746, %v1748
      %1863 = vadd.xlane.f32.xlu0 %v1862
      %v1864 = vpop.xlane.xlu0 %1863
      %v1865 = vadd.f32 %v1750, %v1752
      %1866 = vadd.xlane.f32.xlu0 %v1865
      %v1867 = vpop.xlane.xlu0 %1866
      %v1868 = vadd.f32 %v1754, %v1756
      %1869 = vadd.xlane.f32.xlu0 %v1868
      %v1870 = vpop.xlane.xlu0 %1869
      %v1871 = vadd.f32 %v1758, %v1760
      %1872 = vadd.xlane.f32.xlu0 %v1871
      %v1873 = vpop.xlane.xlu0 %1872
      %v1874 = vadd.f32 %v1762, %v1764
      %1875 = vadd.xlane.f32.xlu0 %v1874
      %v1876 = vpop.xlane.xlu0 %1875
      %v1877 = vadd.f32 %v1766, %v1768
      %1878 = vadd.xlane.f32.xlu0 %v1877
      %v1879 = vpop.xlane.xlu0 %1878
      %v1880 = vadd.f32 %v1770, %v1772
      %1881 = vadd.xlane.f32.xlu0 %v1880
      %v1882 = vpop.xlane.xlu0 %1881
      %v1883 = vadd.f32 %v1774, %v1776
      %1884 = vadd.xlane.f32.xlu0 %v1883
      %v1885 = vpop.xlane.xlu0 %1884
      %v1886 = vadd.f32 %v1778, %v1780
      %1887 = vadd.xlane.f32.xlu0 %v1886
      %v1888 = vpop.xlane.xlu0 %1887
      %v1889 = vadd.f32 %v1782, %v1784
      %1890 = vadd.xlane.f32.xlu0 %v1889
      %v1891 = vpop.xlane.xlu0 %1890
      %v1892 = vadd.f32 %v1786, %v1788
      %1893 = vadd.xlane.f32.xlu0 %v1892
      %v1894 = vpop.xlane.xlu0 %1893
      %v1895 = vadd.f32 %v1790, %v1792
      %1896 = vadd.xlane.f32.xlu0 %v1895
      %v1897 = vpop.xlane.xlu0 %1896
      %v1898 = vadd.f32 %v1794, %v1796
      %1899 = vadd.xlane.f32.xlu0 %v1898
      %v1900 = vpop.xlane.xlu0 %1899
      %v1901 = vadd.f32 %v1798, %v1800
      %1902 = vadd.xlane.f32.xlu0 %v1901
      %v1903 = vpop.xlane.xlu0 %1902
      %v1904 = vadd.f32 %v1802, %v1804
      %1905 = vadd.xlane.f32.xlu0 %v1904
      %v1906 = vpop.xlane.xlu0 %1905
      %v1907 = vadd.f32 %v1806, %v1808
      %1908 = vadd.xlane.f32.xlu0 %v1907
      %v1909 = vpop.xlane.xlu0 %1908
      %v1910 = vadd.f32 %v1810, %v1812
      %1911 = vadd.xlane.f32.xlu0 %v1910
      %v1912 = vpop.xlane.xlu0 %1911
      %v1913 = vadd.f32 %v1814, %v1816
      %1914 = vadd.xlane.f32.xlu0 %v1913
      %v1915 = vpop.xlane.xlu0 %1914
      %v1916 = vadd.f32 %v1818, %v1820
      %1917 = vadd.xlane.f32.xlu0 %v1916
      %v1918 = vpop.xlane.xlu0 %1917
      %v1919 = vadd.f32 %v1822, %v1824
      %1920 = vadd.xlane.f32.xlu0 %v1919
      %v1921 = vpop.xlane.xlu0 %1920
      %v1922 = vadd.f32 %v1826, %v1828
      %1923 = vadd.xlane.f32.xlu0 %v1922
      %v1924 = vpop.xlane.xlu0 %1923
      %v1925 = vrcp.pop %v1831
      %v1926 = vrcp.pop %v1834
      %v1927 = vrcp.pop %v1837
      %v1928 = vrcp.pop %v1840
      %v1929 = vrcp.pop %v1843
      %v1930 = vrcp.pop %v1846
      %v1931 = vrcp.pop %v1849
      %v1932 = vrcp.pop %v1852
      %v1933 = vrcp.pop %v1855
      %v1934 = vrcp.pop %v1858
      %v1935 = vrcp.pop %v1861
      %v1936 = vrcp.pop %v1864
      %v1937 = vrcp.pop %v1867
      %v1938 = vrcp.pop %v1870
      %v1939 = vrcp.pop %v1873
      %v1940 = vrcp.pop %v1876
      %v1941 = vrcp.pop %v1879
      %v1942 = vrcp.pop %v1882
      %v1943 = vrcp.pop %v1885
      %v1944 = vrcp.pop %v1888
      %v1945 = vrcp.pop %v1891
      %v1946 = vrcp.pop %v1894
      %v1947 = vrcp.pop %v1897
      %v1948 = vrcp.pop %v1900
      %v1949 = vrcp.pop %v1903
      %v1950 = vrcp.pop %v1906
      %v1951 = vrcp.pop %v1909
      %v1952 = vrcp.pop %v1912
      %v1953 = vrcp.pop %v1915
      %v1954 = vrcp.pop %v1918
      %v1955 = vrcp.pop %v1921
      %v1956 = vrcp.pop %v1924
      %v1957 = vmul.f32 %v1702, %v1925
      %v1958 = vmul.f32 %v1704, %v1925
      %v1959 = vmul.f32 %v1706, %v1926
      %v1960 = vmul.f32 %v1708, %v1926
      %v1961 = vmul.f32 %v1710, %v1927
      %v1962 = vmul.f32 %v1712, %v1927
      %v1963 = vmul.f32 %v1714, %v1928
      %v1964 = vmul.f32 %v1716, %v1928
      %v1965 = vmul.f32 %v1718, %v1929
      %v1966 = vmul.f32 %v1720, %v1929
      %v1967 = vmul.f32 %v1722, %v1930
      %v1968 = vmul.f32 %v1724, %v1930
      %v1969 = vmul.f32 %v1726, %v1931
      %v1970 = vmul.f32 %v1728, %v1931
      %v1971 = vmul.f32 %v1730, %v1932
      %v1972 = vmul.f32 %v1732, %v1932
      %v1973 = vmul.f32 %v1734, %v1933
      %v1974 = vmul.f32 %v1736, %v1933
      %v1975 = vmul.f32 %v1738, %v1934
      %v1976 = vmul.f32 %v1740, %v1934
      %v1977 = vmul.f32 %v1742, %v1935
      %v1978 = vmul.f32 %v1744, %v1935
      %v1979 = vmul.f32 %v1746, %v1936
      %v1980 = vmul.f32 %v1748, %v1936
      %v1981 = vmul.f32 %v1750, %v1937
      %v1982 = vmul.f32 %v1752, %v1937
      %v1983 = vmul.f32 %v1754, %v1938
      %v1984 = vmul.f32 %v1756, %v1938
      %v1985 = vmul.f32 %v1758, %v1939
      %v1986 = vmul.f32 %v1760, %v1939
      %v1987 = vmul.f32 %v1762, %v1940
      %v1988 = vmul.f32 %v1764, %v1940
      %v1989 = vmul.f32 %v1766, %v1941
      %v1990 = vmul.f32 %v1768, %v1941
      %v1991 = vmul.f32 %v1770, %v1942
      %v1992 = vmul.f32 %v1772, %v1942
      %v1993 = vmul.f32 %v1774, %v1943
      %v1994 = vmul.f32 %v1776, %v1943
      %v1995 = vmul.f32 %v1778, %v1944
      %v1996 = vmul.f32 %v1780, %v1944
      %v1997 = vmul.f32 %v1782, %v1945
      %v1998 = vmul.f32 %v1784, %v1945
      %v1999 = vmul.f32 %v1786, %v1946
      %v2000 = vmul.f32 %v1788, %v1946
      %v2001 = vmul.f32 %v1790, %v1947
      %v2002 = vmul.f32 %v1792, %v1947
      %v2003 = vmul.f32 %v1794, %v1948
      %v2004 = vmul.f32 %v1796, %v1948
      %v2005 = vmul.f32 %v1798, %v1949
      %v2006 = vmul.f32 %v1800, %v1949
      %v2007 = vmul.f32 %v1802, %v1950
      %v2008 = vmul.f32 %v1804, %v1950
      %v2009 = vmul.f32 %v1806, %v1951
      %v2010 = vmul.f32 %v1808, %v1951
      %v2011 = vmul.f32 %v1810, %v1952
      %v2012 = vmul.f32 %v1812, %v1952
      %v2013 = vmul.f32 %v1814, %v1953
      %v2014 = vmul.f32 %v1816, %v1953
      %v2015 = vmul.f32 %v1818, %v1954
      %v2016 = vmul.f32 %v1820, %v1954
      %v2017 = vmul.f32 %v1822, %v1955
      %v2018 = vmul.f32 %v1824, %v1955
      %v2019 = vmul.f32 %v1826, %v1956
      %v2020 = vmul.f32 %v1828, %v1956
      %v2021 = vpack.c.bf16 %v1959, %v1957
      %v2022 = vpack.c.bf16 %v1960, %v1958
      %v2023 = vpack.c.bf16 %v1963, %v1961
      %v2024 = vpack.c.bf16 %v1964, %v1962
      %v2025 = vpack.c.bf16 %v1967, %v1965
      %v2026 = vpack.c.bf16 %v1968, %v1966
      %v2027 = vpack.c.bf16 %v1971, %v1969
      %v2028 = vpack.c.bf16 %v1972, %v1970
      %v2029 = vpack.c.bf16 %v1975, %v1973
      %v2030 = vpack.c.bf16 %v1976, %v1974
      %v2031 = vpack.c.bf16 %v1979, %v1977
      %v2032 = vpack.c.bf16 %v1980, %v1978
      %v2033 = vpack.c.bf16 %v1983, %v1981
      %v2034 = vpack.c.bf16 %v1984, %v1982
      %v2035 = vpack.c.bf16 %v1987, %v1985
      %v2036 = vpack.c.bf16 %v1988, %v1986
      %v2037 = vpack.c.bf16 %v1991, %v1989
      %v2038 = vpack.c.bf16 %v1992, %v1990
      %v2039 = vpack.c.bf16 %v1995, %v1993
      %v2040 = vpack.c.bf16 %v1996, %v1994
      %v2041 = vpack.c.bf16 %v1999, %v1997
      %v2042 = vpack.c.bf16 %v2000, %v1998
      %v2043 = vpack.c.bf16 %v2003, %v2001
      %v2044 = vpack.c.bf16 %v2004, %v2002
      %v2045 = vpack.c.bf16 %v2007, %v2005
      %v2046 = vpack.c.bf16 %v2008, %v2006
      %v2047 = vpack.c.bf16 %v2011, %v2009
      %v2048 = vpack.c.bf16 %v2012, %v2010
      %v2049 = vpack.c.bf16 %v2015, %v2013
      %v2050 = vpack.c.bf16 %v2016, %v2014
      %v2051 = vpack.c.bf16 %v2019, %v2017
      %v2052 = vpack.c.bf16 %v2020, %v2018
      %2053 = vmatprep.subr.bf16.mxu0 0
      %2054 = vmatpush1.bf16.msra.mxu0 %v473
      %2055 = vmatprep.subr.bf16.mxu0 0
      %2056 = vmatpush1.bf16.msra.mxu0 %v474
      %2057 = vmatprep.subr.bf16.mxu0 0
      %2058 = vmatpush1.bf16.msra.mxu0 %v475
      %2059 = vmatprep.subr.bf16.mxu0 0
      %2060 = vmatpush1.bf16.msra.mxu0 %v476
      %2061 = vmatprep.subr.bf16.mxu0 0
      %2062 = vmatpush1.bf16.msra.mxu0 %v477
      %2063 = vmatprep.subr.bf16.mxu0 0
      %2064 = vmatpush1.bf16.msra.mxu0 %v478
      %2065 = vmatprep.subr.bf16.mxu0 0
      %2066 = vmatpush1.bf16.msra.mxu0 %v479
      %2067 = vmatprep.subr.bf16.mxu0 0
      %2068 = vmatpush1.bf16.msra.mxu0 %v480
      %2069 = vmatprep.subr.bf16.mxu0 0
      %2070 = vmatpush1.bf16.msra.mxu0 %v481
      %2071 = vmatprep.subr.bf16.mxu0 0
      %2072 = vmatpush1.bf16.msra.mxu0 %v482
      %2073 = vmatprep.subr.bf16.mxu0 0
      %2074 = vmatpush1.bf16.msra.mxu0 %v483
      %2075 = vmatprep.subr.bf16.mxu0 0
      %2076 = vmatpush1.bf16.msra.mxu0 %v484
      %2077 = vmatprep.subr.bf16.mxu0 0
      %2078 = vmatpush1.bf16.msra.mxu0 %v485
      %2079 = vmatprep.subr.bf16.mxu0 0
      %2080 = vmatpush1.bf16.msra.mxu0 %v486
      %2081 = vmatprep.subr.bf16.mxu0 0
      %2082 = vmatpush1.bf16.msra.mxu0 %v487
      %2083 = vmatprep.subr.bf16.mxu0 0
      %2084 = vmatpush1.bf16.msra.mxu0 %v488
      %2085 = vmatprep.mubr.bf16.mxu0 %v2022
      %2086 = vmatmul.mubr.bf16.gmra.mrb[0].mxu0 %v2021
      %v2087 = vpop.f32.mrb[0].mxu0
      %v2088 = vadd.f32 0.0, %v2087
      %v2089 = vpop.f32.mrb[0].mxu0
      %v2090 = vpop.f32.mrb[0].mxu0
      %v2091 = vadd.f32 0.0, %v2090
      %v2092 = vpop.f32.mrb[0].mxu0
      %2093 = vmatprep.mubr.bf16.mxu0 %v2024
      %2094 = vmatmul.mubr.bf16.gmra.mrb[0].mxu0 %v2023
      %v2095 = vpop.f32.mrb[0].mxu0
      %v2096 = vadd.f32 0.0, %v2095
      %v2097 = vpop.f32.mrb[0].mxu0
      %v2098 = vpop.f32.mrb[0].mxu0
      %v2099 = vadd.f32 0.0, %v2098
      %v2100 = vpop.f32.mrb[0].mxu0
      %2101 = vmatprep.mubr.bf16.mxu0 %v2026
      %2102 = vmatmul.mubr.bf16.gmra.mrb[0].mxu0 %v2025
      %v2103 = vpop.f32.mrb[0].mxu0
      %v2104 = vadd.f32 0.0, %v2103
      %v2105 = vpop.f32.mrb[0].mxu0
      %v2106 = vpop.f32.mrb[0].mxu0
      %v2107 = vadd.f32 0.0, %v2106
      %v2108 = vpop.f32.mrb[0].mxu0
      %2109 = vmatprep.mubr.bf16.mxu0 %v2028
      %2110 = vmatmul.mubr.bf16.gmra.mrb[0].mxu0 %v2027
      %v2111 = vpop.f32.mrb[0].mxu0
      %v2112 = vadd.f32 0.0, %v2111
      %v2113 = vpop.f32.mrb[0].mxu0
      %v2114 = vpop.f32.mrb[0].mxu0
      %v2115 = vadd.f32 0.0, %v2114
      %v2116 = vpop.f32.mrb[0].mxu0
      %2117 = vmatprep.mubr.bf16.mxu0 %v2030
      %2118 = vmatmul.mubr.bf16.gmra.mrb[0].mxu0 %v2029
      %v2119 = vpop.f32.mrb[0].mxu0
      %v2120 = vadd.f32 0.0, %v2119
      %v2121 = vpop.f32.mrb[0].mxu0
      %v2122 = vpop.f32.mrb[0].mxu0
      %v2123 = vadd.f32 0.0, %v2122
      %v2124 = vpop.f32.mrb[0].mxu0
      %2125 = vmatprep.mubr.bf16.mxu0 %v2032
      %2126 = vmatmul.mubr.bf16.gmra.mrb[0].mxu0 %v2031
      %v2127 = vpop.f32.mrb[0].mxu0
      %v2128 = vadd.f32 0.0, %v2127
      %v2129 = vpop.f32.mrb[0].mxu0
      %v2130 = vpop.f32.mrb[0].mxu0
      %v2131 = vadd.f32 0.0, %v2130
      %v2132 = vpop.f32.mrb[0].mxu0
      %2133 = vmatprep.mubr.bf16.mxu0 %v2034
      %2134 = vmatmul.mubr.bf16.gmra.mrb[0].mxu0 %v2033
      %v2135 = vpop.f32.mrb[0].mxu0
      %v2136 = vadd.f32 0.0, %v2135
      %v2137 = vpop.f32.mrb[0].mxu0
      %v2138 = vpop.f32.mrb[0].mxu0
      %v2139 = vadd.f32 0.0, %v2138
      %v2140 = vpop.f32.mrb[0].mxu0
      %2141 = vmatprep.mubr.bf16.mxu0 %v2036
      %2142 = vmatmul.mubr.bf16.gmra.mrb[0].mxu0 %v2035
      %v2143 = vpop.f32.mrb[0].mxu0
      %v2144 = vadd.f32 0.0, %v2143
      %v2145 = vpop.f32.mrb[0].mxu0
      %v2146 = vpop.f32.mrb[0].mxu0
      %v2147 = vadd.f32 0.0, %v2146
      %v2148 = vpop.f32.mrb[0].mxu0
      %2149 = vmatprep.mubr.bf16.mxu0 %v2038
      %2150 = vmatmul.mubr.bf16.gmra.mrb[0].mxu0 %v2037
      %v2151 = vpop.f32.mrb[0].mxu0
      %v2152 = vadd.f32 0.0, %v2151
      %v2153 = vpop.f32.mrb[0].mxu0
      %v2154 = vpop.f32.mrb[0].mxu0
      %v2155 = vadd.f32 0.0, %v2154
      %v2156 = vpop.f32.mrb[0].mxu0
      %2157 = vmatprep.mubr.bf16.mxu0 %v2040
      %2158 = vmatmul.mubr.bf16.gmra.mrb[0].mxu0 %v2039
      %v2159 = vpop.f32.mrb[0].mxu0
      %v2160 = vadd.f32 0.0, %v2159
      %v2161 = vpop.f32.mrb[0].mxu0
      %v2162 = vpop.f32.mrb[0].mxu0
      %v2163 = vadd.f32 0.0, %v2162
      %v2164 = vpop.f32.mrb[0].mxu0
      %2165 = vmatprep.mubr.bf16.mxu0 %v2042
      %2166 = vmatmul.mubr.bf16.gmra.mrb[0].mxu0 %v2041
      %v2167 = vpop.f32.mrb[0].mxu0
      %v2168 = vadd.f32 0.0, %v2167
      %v2169 = vpop.f32.mrb[0].mxu0
      %v2170 = vpop.f32.mrb[0].mxu0
      %v2171 = vadd.f32 0.0, %v2170
      %v2172 = vpop.f32.mrb[0].mxu0
      %2173 = vmatprep.mubr.bf16.mxu0 %v2044
      %2174 = vmatmul.mubr.bf16.gmra.mrb[0].mxu0 %v2043
      %v2175 = vpop.f32.mrb[0].mxu0
      %v2176 = vadd.f32 0.0, %v2175
      %v2177 = vpop.f32.mrb[0].mxu0
      %v2178 = vpop.f32.mrb[0].mxu0
      %v2179 = vadd.f32 0.0, %v2178
      %v2180 = vpop.f32.mrb[0].mxu0
      %2181 = vmatprep.mubr.bf16.mxu0 %v2046
      %2182 = vmatmul.mubr.bf16.gmra.mrb[0].mxu0 %v2045
      %v2183 = vpop.f32.mrb[0].mxu0
      %v2184 = vadd.f32 0.0, %v2183
      %v2185 = vpop.f32.mrb[0].mxu0
      %v2186 = vpop.f32.mrb[0].mxu0
      %v2187 = vadd.f32 0.0, %v2186
      %v2188 = vpop.f32.mrb[0].mxu0
      %2189 = vmatprep.mubr.bf16.mxu0 %v2048
      %2190 = vmatmul.mubr.bf16.gmra.mrb[0].mxu0 %v2047
      %v2191 = vpop.f32.mrb[0].mxu0
      %v2192 = vadd.f32 0.0, %v2191
      %v2193 = vpop.f32.mrb[0].mxu0
      %v2194 = vpop.f32.mrb[0].mxu0
      %v2195 = vadd.f32 0.0, %v2194
      %v2196 = vpop.f32.mrb[0].mxu0
      %2197 = vmatprep.mubr.bf16.mxu0 %v2050
      %2198 = vmatmul.mubr.bf16.gmra.mrb[0].mxu0 %v2049
      %v2199 = vpop.f32.mrb[0].mxu0
      %v2200 = vadd.f32 0.0, %v2199
      %v2201 = vpop.f32.mrb[0].mxu0
      %v2202 = vpop.f32.mrb[0].mxu0
      %v2203 = vadd.f32 0.0, %v2202
      %v2204 = vpop.f32.mrb[0].mxu0
      %2205 = vmatprep.mubr.bf16.mxu0 %v2052
      %2206 = vmatmul.mubr.bf16.gmra.mrb[0].mxu0 %v2051
      %v2207 = vpop.f32.mrb[0].mxu0
      %v2208 = vadd.f32 0.0, %v2207
      %v2209 = vpop.f32.mrb[0].mxu0
      %v2210 = vpop.f32.mrb[0].mxu0
      %v2211 = vadd.f32 0.0, %v2210
      %v2212 = vpop.f32.mrb[0].mxu0
      %2213 = vdwg.mxu0
      %2214 = vst [vmem:[%s245] sm:$0xff] %v2088
      %2215 = vst [vmem:[%s245 + $0x8] sm:$0xff] %v2091
      %2216 = vst [vmem:[%s245 + $0x10] sm:$0xff] %v2096
      %2217 = vst [vmem:[%s245 + $0x18] sm:$0xff] %v2099
      %2218 = vst [vmem:[%s245 + $0x20] sm:$0xff] %v2104
      %2219 = vst [vmem:[%s245 + $0x28] sm:$0xff] %v2107
      %2220 = vst [vmem:[%s245 + $0x30] sm:$0xff] %v2112
      %2221 = vst [vmem:[%s245 + $0x38] sm:$0xff] %v2115
      %2222 = vst [vmem:[%s245 + $0x40] sm:$0xff] %v2120
      %2223 = vst [vmem:[%s245 + $0x48] sm:$0xff] %v2123
      %2224 = vst [vmem:[%s245 + $0x50] sm:$0xff] %v2128
      %2225 = vst [vmem:[%s245 + $0x58] sm:$0xff] %v2131
      %2226 = vst [vmem:[%s245 + $0x60] sm:$0xff] %v2136
      %2227 = vst [vmem:[%s245 + $0x68] sm:$0xff] %v2139
      %2228 = vst [vmem:[%s245 + $0x70] sm:$0xff] %v2144
      %2229 = vst [vmem:[%s245 + $0x78] sm:$0xff] %v2147
      %2230 = vst [vmem:[%s245 + $0x80] sm:$0xff] %v2152
      %2231 = vst [vmem:[%s245 + $0x88] sm:$0xff] %v2155
      %2232 = vst [vmem:[%s245 + $0x90] sm:$0xff] %v2160
      %2233 = vst [vmem:[%s245 + $0x98] sm:$0xff] %v2163
      %2234 = vst [vmem:[%s245 + $0xa0] sm:$0xff] %v2168
      %2235 = vst [vmem:[%s245 + $0xa8] sm:$0xff] %v2171
      %2236 = vst [vmem:[%s245 + $0xb0] sm:$0xff] %v2176
      %2237 = vst [vmem:[%s245 + $0xb8] sm:$0xff] %v2179
      %2238 = vst [vmem:[%s245 + $0xc0] sm:$0xff] %v2184
      %2239 = vst [vmem:[%s245 + $0xc8] sm:$0xff] %v2187
      %2240 = vst [vmem:[%s245 + $0xd0] sm:$0xff] %v2192
      %2241 = vst [vmem:[%s245 + $0xd8] sm:$0xff] %v2195
      %2242 = vst [vmem:[%s245 + $0xe0] sm:$0xff] %v2200
      %2243 = vst [vmem:[%s245 + $0xe8] sm:$0xff] %v2203
      %2244 = vst [vmem:[%s245 + $0xf0] sm:$0xff] %v2208
      %2245 = vst [vmem:[%s245 + $0xf8] sm:$0xff] %v2211
      %s2246 = smul.u32 32, %s19
      %p2247 = scmp.lt.s32.totalorder %s18, 1
      %s2248 = scalar_select %p2247, %s18, 1
      %p2249 = scmp.lt.s32.totalorder %s2246, 31
      %s2250 = scalar_select %p2249, %s2246, 31
      %s2251 = smul.addr %s2248, 32
      %s2252 = sadd.s32 %s2250, %s2251
      %s2253 = smul.addr %s2252, 8
      %s2254 = scalar_lea.vmem %s3, %s2253
      // Predicated region
      $region33: #{contextual_block_tf_style.1} parent=31 // pred_check
        %p2255 = pneg %p126
      $region34: #{contextual_block_tf_style.1} parent=31 // pred_check_branch
        %2257 = sbr.rel (%p2255) target = $region36
      $region35: #{contextual_block_tf_style.1} parent=31 // pred_region
        %s2258 = smul.u32 32, %s19
      $region36: #{contextual_block_tf_style.1} parent=31 // pred_fallthru
        _
    $region32: #{contextual_block_tf_style.1} parent=5 // pred_fallthru
      _
    %p2259 = scmp.le.s32.totalorder 2, %s9
    // Predicated region
    $region37: #{contextual_block_tf_style.1} parent=5 // pred_check
      %p2260 = pneg %p2259
    $region38: #{contextual_block_tf_style.1} parent=5 // pred_check_branch
      %2262 = sbr.rel (%p2260) target = $region40
    $region39: #{contextual_block_tf_style.1} parent=5 // pred_region
      %s2263 = ssub.s32 %s9, 2
      // Predicated region
      $region41: #{contextual_block_tf_style.1} parent=39 // pred_check
        %p2264 = pneg %p132
      $region42: #{contextual_block_tf_style.1} parent=39 // pred_check_branch
        %2266 = sbr.rel (%p2264) target = $region44
      $region43: #{contextual_block_tf_style.1} parent=39 // pred_region
        %s2267 = smul.u32 32, %s21
        %p2268 = scmp.lt.s32.totalorder %s20, 1
        %s2269 = scalar_select %p2268, %s20, 1
        %p2270 = scmp.lt.s32.totalorder %s2267, 31
        %s2271 = scalar_select %p2270, %s2267, 31
        %s2272 = smul.addr %s2269, 32
        %s2273 = sadd.s32 %s2271, %s2272
        %s2274 = smul.addr %s2273, 8
        %s2275 = scalar_lea.vmem %s3, %s2274
      $region44: #{contextual_block_tf_style.1} parent=39 // pred_fallthru
        _
    $region40: #{contextual_block_tf_style.1} parent=5 // pred_fallthru
      _
  $region6: #{contextual_block_tf_style.1} parent=0 // loop_footer
    %s13 = sadd.s32 1, %s9
  $region7: #{contextual_block_tf_style.1} parent=0 // loop_footer_branch
    %8 = sbr.rel target = $region3
  $region8: #{contextual_block_tf_style.1} parent=0 // loop_exit
    _

</llo_original>
